<compile_context>
chip_gen: v5e
topology: v5e:2x2
jax: 0.10.0
libtpu: 0.0.40
codegen_flags: <defaults>
</compile_context>

<pallas_src>
import functools
import math

import jax
import jax.numpy as jnp
from jax.experimental import pallas as pl
from jax.experimental.pallas import tpu as pltpu  # noqa: F401  (no scratch needed anymore)


# ----------------------------------------------------------------------------
# Activation (shared by the Pallas kernel and the pure-JAX reference)
# ----------------------------------------------------------------------------
def _apply_activation(x, name):
    if name == "relu":
        return jnp.maximum(x, 0.0)
    if name == "tanh":
        return jnp.tanh(x)
    if name == "sigmoid":
        return 1.0 / (1.0 + jnp.exp(-x))
    if name == "elu":
        return jnp.where(x > 0, x, jnp.exp(jnp.minimum(x, 0.0)) - 1.0)
    if name == "selu":
        alpha = 1.6732632423543772
        scale = 1.0507009873554805
        return scale * jnp.where(x > 0, x, alpha * (jnp.exp(jnp.minimum(x, 0.0)) - 1.0))
    if name == "leaky_relu":
        return jnp.where(x > 0, x, 0.01 * x)
    raise ValueError(f"unknown activation: {name}")


# ----------------------------------------------------------------------------
# Fused whole-network Pallas kernel
# ----------------------------------------------------------------------------
def make_rnn_kernel(activation):
    """Kernel operands (all fully resident in VMEM):
         x_pad   (T, P)        input rows, feature dim zero-padded to P
         xT_pad  (P, T)        same, transposed (column layout)
         w_row   (L, P+H+1, H) per layer: [ W_ih^T (P,H) ; W_hh^T (H,H) ; b (1,H) ]
         w_col   (L, H, P+H+1) per layer: [ W_ih (H,P) | W_hh (H,H) | b (H,1) ]
         head    (H+1, C)      [ W_out^T (H,C) ; b_out (1,C) ]
         out     (T, C)        log-softmax logits
    """

    def kernel(x_ref, xT_ref, w_row_ref, w_col_ref, head_ref, o_ref):
        T, P = x_ref.shape
        L, _, H = w_row_ref.shape

        inp = x_ref[...]        # (T, P)  activations, row layout
        inpT = xT_ref[...]      # (P, T)  activations, column layout

        for l in range(L):                       # static unroll over layers
            in_dim = P if l == 0 else H          # layer 0 consumes the padded input
            last_layer = (l + 1 == L)

            wrow = w_row_ref[l]                  # (P+H+1, H)
            wcol = w_col_ref[l]                  # (H, P+H+1)

            wih_T = wrow[0:in_dim, :]            # (in_dim, H)  matmul-ready
            whh_T = wrow[P:P + H, :]             # (H, H)  [H_in sublane, H_out lane]
            b_row = wrow[P + H:P + H + 1, :]     # (1, H)  pre-summed b_ih + b_hh

            wih = wcol[:, 0:in_dim]              # (H, in_dim)
            whh = wcol[:, P:P + H]               # (H, H)  [H_out sublane, H_in lane]
            b_col = wcol[:, P + H:P + H + 1]     # (H, 1)

            # Time-parallel input projection: one MXU matmul per layout for ALL
            # timesteps, bias folded in.
            xw = jnp.dot(inp, wih_T, preferred_element_type=jnp.float32) + b_row    # (T, H)
            xwT = jnp.dot(wih, inpT, preferred_element_type=jnp.float32) + b_col    # (H, T)

            # Sequential tanh recurrence (unrolled, T small & static).  The
            # hidden state is carried in both row and column layouts so each
            # step is broadcast + VPU multiply + XLU reduce + EUP tanh — no
            # per-step MXU round trip and no per-step transpose.
            h_row = jnp.zeros((1, H), jnp.float32)
            h_col = jnp.zeros((H, 1), jnp.float32)
            rows = []
            cols = []
            for t in range(T):
                # (h_{t-1} @ W_hh^T) in row layout: sublane-reduce of W_hh^T * h_col
                y_row = jnp.sum(whh_T * h_col, axis=0, keepdims=True)   # (1, H)
                # same value in column layout: lane-reduce of W_hh * h_row
                y_col = jnp.sum(whh * h_row, axis=1, keepdims=True)     # (H, 1)
                h_row = jnp.tanh(xw[t:t + 1, :] + y_row)                # (1, H)
                h_col = jnp.tanh(xwT[:, t:t + 1] + y_col)               # (H, 1)
                rows.append(h_row)
                if not last_layer:
                    cols.append(h_col)

            # Next layer's input, assembled from vregs (no VMEM scratch round trip).
            inp = jnp.concatenate(rows, axis=0)          # (T, H)
            if not last_layer:
                inpT = jnp.concatenate(cols, axis=1)     # (H, T)

        # lstm_out.view(T, -1) -> activation -> Linear -> log_softmax(dim=1)
        head = head_ref[...]                             # (H+1, C)
        w_out_T = head[0:H, :]                           # (H, C)
        b_out = head[H:H + 1, :]                         # (1, C)
        a = _apply_activation(inp, activation)                                   # (T, H)
        logits = jnp.dot(a, w_out_T, preferred_element_type=jnp.float32) + b_out  # (T, C)
        m = jnp.max(logits, axis=1, keepdims=True)
        s = logits - m
        lse = jnp.log(jnp.sum(jnp.exp(s), axis=1, keepdims=True))
        o_ref[...] = (s - lse).astype(o_ref.dtype)

    return kernel


# ----------------------------------------------------------------------------
# Wrapper: parameter packing + one pallas_call for the whole forward pass
# ----------------------------------------------------------------------------
@functools.partial(jax.jit, static_argnames=("activation",))
def rnn_forward(params, x, activation="relu"):
    """x: (seq_len, batch=1, input_size)  ->  log-softmax logits (seq_len, num_classes)."""
    T, B, I = x.shape
    assert B == 1, "module's view(len(x), -1) + Linear(hidden_dim, .) requires batch=1"

    L = len(params["layers"])
    H = params["layers"][0]["w_hh"].shape[0]
    C = params["w_out"].shape[0]
    P = ((max(I, H) + 7) // 8) * 8   # padded first-layer input width (sublane-aligned)

    f32 = jnp.float32
    x2 = x.reshape(T, I).astype(f32)
    x_pad = jnp.zeros((T, P), f32).at[:, :I].set(x2)
    xT_pad = x_pad.T

    wrow_layers = []
    wcol_layers = []
    for l, lp in enumerate(params["layers"]):
        in_dim = I if l == 0 else H
        wih = lp["w_ih"].astype(f32)                         # (H, in_dim)
        whh = lp["w_hh"].astype(f32)                         # (H, H)
        b = (lp["b_ih"] + lp["b_hh"]).astype(f32)            # (H,)  pre-summed

        wih_T_pad = jnp.zeros((P, H), f32).at[:in_dim, :].set(wih.T)
        wrow_layers.append(
            jnp.concatenate([wih_T_pad, whh.T, b.reshape(1, H)], axis=0))   # (P+H+1, H)

        wih_pad = jnp.zeros((H, P), f32).at[:, :in_dim].set(wih)
        wcol_layers.append(
            jnp.concatenate([wih_pad, whh, b.reshape(H, 1)], axis=1))       # (H, P+H+1)

    w_row = jnp.stack(wrow_layers, axis=0)                   # (L, P+H+1, H)
    w_col = jnp.stack(wcol_layers, axis=0)                   # (L, H, P+H+1)
    head = jnp.concatenate([params["w_out"].T.astype(f32),
                            params["b_out"].reshape(1, C).astype(f32)], axis=0)  # (H+1, C)

    kernel = make_rnn_kernel(activation)
    out = pl.pallas_call(
        kernel,
        out_shape=jax.ShapeDtypeStruct((T, C), jnp.float32),
    )(x_pad, xT_pad, w_row, w_col, head)
    return out


# ----------------------------------------------------------------------------
# Pure-JAX reference (for correctness check)
# ----------------------------------------------------------------------------
def rnn_forward_reference(params, x, activation):
    T, B, I = x.shape
    inp = x.reshape(T, B * I)
    for lp in params["layers"]:
        H = lp["w_hh"].shape[0]

        def step(h, xt, lp=lp):
            h_new = jnp.tanh(xt @ lp["w_ih"].T + lp["b_ih"] + h @ lp["w_hh"].T + lp["b_hh"])
            return h_new, h_new

        _, outs = jax.lax.scan(step, jnp.zeros((H,), jnp.float32), inp)
        inp = outs
    a = _apply_activation(inp, activation)
    logits = a @ params["w_out"].T + params["b_out"]
    return jax.nn.log_softmax(logits, axis=1)


# ----------------------------------------------------------------------------
# Parameter init (PyTorch nn.RNN / nn.Linear conventions & layouts)
# ----------------------------------------------------------------------------
def init_rnn_params(key, input_size, hidden_dim, num_layers, num_classes):
    k = 1.0 / math.sqrt(hidden_dim)
    keys = jax.random.split(key, num_layers * 4 + 2)
    ki = iter(keys)

    def u(rng, shape):
        return jax.random.uniform(rng, shape, minval=-k, maxval=k, dtype=jnp.float32)

    layers = []
    for l in range(num_layers):
        in_dim = input_size if l == 0 else hidden_dim
        layers.append({
            "w_ih": u(next(ki), (hidden_dim, in_dim)),
            "w_hh": u(next(ki), (hidden_dim, hidden_dim)),
            "b_ih": u(next(ki), (hidden_dim,)),
            "b_hh": u(next(ki), (hidden_dim,)),
        })
    w_out = u(next(ki), (num_classes, hidden_dim))
    b_out = u(next(ki), (num_classes,))
    return {"layers": layers, "w_out": w_out, "b_out": b_out}


# ----------------------------------------------------------------------------
if __name__ == "__main__":
    opts = {
        "input_size": 16,
        "hidden_dim": 32,
        "num_layers": 2,
        "dropout": 0.0,
        "batch_first": False,
        "bidirectional": False,
        "num_classes": 8,
        "batch_size": 1,
        "activation_fun": "relu",
    }
    T = 8  # sequence length

    key = jax.random.PRNGKey(0)
    pkey, xkey = jax.random.split(key)
    params = init_rnn_params(pkey, opts["input_size"], opts["hidden_dim"],
                             opts["num_layers"], opts["num_classes"])
    # x: (seq_len, batch, input_size) -- batch_first=False convention
    x = jax.random.normal(
        xkey, (T, opts["batch_size"], opts["input_size"]), dtype=jnp.float32)

    out = rnn_forward(params, x, activation=opts["activation_fun"])
    out = jax.block_until_ready(out)

    assert out.shape == (T, opts["num_classes"]), out.shape
    assert bool(jnp.all(jnp.isfinite(out)))
    # log_softmax rows must exponentiate-sum to 1
    assert bool(jnp.allclose(jnp.exp(out).sum(axis=1), 1.0, atol=1e-4))

    ref = rnn_forward_reference(params, x, opts["activation_fun"])
    assert bool(jnp.allclose(out, ref, rtol=1e-3, atol=1e-3)), \
        float(jnp.max(jnp.abs(out - ref)))

    print("KERNEL_OK")
</pallas_src>

<mosaic_0001>
module attributes {stable_mosaic.version = 11 : i64} {
  func.func @kernel(%arg0: memref<8x32xf32, #tpu.memory_space<vmem>>, %arg1: memref<32x8xf32, #tpu.memory_space<vmem>>, %arg2: memref<2x65x32xf32, #tpu.memory_space<vmem>>, %arg3: memref<2x32x65xf32, #tpu.memory_space<vmem>>, %arg4: memref<33x8xf32, #tpu.memory_space<vmem>>, %arg5: memref<8x8xf32, #tpu.memory_space<vmem>>) attributes {dimension_semantics = [], scalar_prefetch = 0 : i64, scratch_operands = 0 : i64, tpu.core_type = #tpu.core_type<tc>} {
    %c0 = arith.constant 0 : index
    %c0_0 = arith.constant 0 : index
    %0 = vector.load %arg0[%c0, %c0_0] : memref<8x32xf32, #tpu.memory_space<vmem>>, vector<8x32xf32>
    %c0_1 = arith.constant 0 : index
    %c0_2 = arith.constant 0 : index
    %1 = vector.load %arg1[%c0_1, %c0_2] : memref<32x8xf32, #tpu.memory_space<vmem>>, vector<32x8xf32>
    %c0_3 = arith.constant 0 : index
    %c0_4 = arith.constant 0 : index
    %c0_5 = arith.constant 0 : index
    %2 = vector.load %arg2[%c0_3, %c0_4, %c0_5] : memref<2x65x32xf32, #tpu.memory_space<vmem>>, vector<1x65x32xf32>
    %3 = vector.shape_cast %2 : vector<1x65x32xf32> to vector<65x32xf32>
    %c0_6 = arith.constant 0 : index
    %c0_7 = arith.constant 0 : index
    %c0_8 = arith.constant 0 : index
    %4 = vector.load %arg3[%c0_6, %c0_7, %c0_8] : memref<2x32x65xf32, #tpu.memory_space<vmem>>, vector<1x32x65xf32>
    %5 = vector.shape_cast %4 : vector<1x32x65xf32> to vector<32x65xf32>
    %6 = vector.extract_strided_slice %3 {offsets = [0, 0], sizes = [32, 32], strides = [1, 1]} : vector<65x32xf32> to vector<32x32xf32>
    %7 = vector.extract_strided_slice %3 {offsets = [32, 0], sizes = [32, 32], strides = [1, 1]} : vector<65x32xf32> to vector<32x32xf32>
    %8 = vector.extract_strided_slice %3 {offsets = [64, 0], sizes = [1, 32], strides = [1, 1]} : vector<65x32xf32> to vector<1x32xf32>
    %9 = vector.extract_strided_slice %5 {offsets = [0, 0], sizes = [32, 32], strides = [1, 1]} : vector<32x65xf32> to vector<32x32xf32>
    %10 = vector.extract_strided_slice %5 {offsets = [0, 32], sizes = [32, 32], strides = [1, 1]} : vector<32x65xf32> to vector<32x32xf32>
    %11 = vector.extract_strided_slice %5 {offsets = [0, 64], sizes = [32, 1], strides = [1, 1]} : vector<32x65xf32> to vector<32x1xf32>
    %cst = arith.constant dense<0.000000e+00> : vector<8x32xf32>
    %12 = tpu.matmul %0, %6, %cst {dimension_numbers = #tpu.dot_dimension_numbers<[1], [0], [0], [1], [0, 0, 1, 1], [], []>} : vector<8x32xf32>, vector<32x32xf32>, vector<8x32xf32> -> vector<8x32xf32>
    %13 = vector.broadcast %8 : vector<1x32xf32> to vector<8x32xf32>
    %14 = arith.addf %12, %13 : vector<8x32xf32>
    %cst_9 = arith.constant dense<0.000000e+00> : vector<32x8xf32>
    %15 = tpu.matmul %9, %1, %cst_9 {dimension_numbers = #tpu.dot_dimension_numbers<[1], [0], [0], [1], [0, 0, 1, 1], [], []>} : vector<32x32xf32>, vector<32x8xf32>, vector<32x8xf32> -> vector<32x8xf32>
    %16 = vector.broadcast %11 : vector<32x1xf32> to vector<32x8xf32>
    %17 = arith.addf %15, %16 : vector<32x8xf32>
    %cst_10 = arith.constant 0.000000e+00 : f32
    %18 = vector.broadcast %cst_10 : f32 to vector<1x32xf32>
    %cst_11 = arith.constant 0.000000e+00 : f32
    %19 = vector.broadcast %cst_11 : f32 to vector<32x1xf32>
    %20 = vector.broadcast %19 : vector<32x1xf32> to vector<32x32xf32>
    %21 = arith.mulf %7, %20 : vector<32x32xf32>
    %cst_12 = arith.constant dense<0.000000e+00> : vector<32xf32>
    %22 = vector.multi_reduction <add>, %21, %cst_12 [0] : vector<32x32xf32> to vector<32xf32>
    %23 = vector.shape_cast %22 : vector<32xf32> to vector<1x32xf32>
    %24 = vector.broadcast %18 : vector<1x32xf32> to vector<32x32xf32>
    %25 = arith.mulf %10, %24 : vector<32x32xf32>
    %cst_13 = arith.constant dense<0.000000e+00> : vector<32xf32>
    %26 = vector.multi_reduction <add>, %25, %cst_13 [1] : vector<32x32xf32> to vector<32xf32>
    %27 = vector.shape_cast %26 : vector<32xf32> to vector<32x1xf32>
    %28 = vector.extract_strided_slice %14 {offsets = [0, 0], sizes = [1, 32], strides = [1, 1]} : vector<8x32xf32> to vector<1x32xf32>
    %29 = arith.addf %28, %23 : vector<1x32xf32>
    %30 = math.tanh %29 : vector<1x32xf32>
    %31 = vector.extract_strided_slice %17 {offsets = [0, 0], sizes = [32, 1], strides = [1, 1]} : vector<32x8xf32> to vector<32x1xf32>
    %32 = arith.addf %31, %27 : vector<32x1xf32>
    %33 = math.tanh %32 : vector<32x1xf32>
    %34 = vector.broadcast %33 : vector<32x1xf32> to vector<32x32xf32>
    %35 = arith.mulf %7, %34 : vector<32x32xf32>
    %cst_14 = arith.constant dense<0.000000e+00> : vector<32xf32>
    %36 = vector.multi_reduction <add>, %35, %cst_14 [0] : vector<32x32xf32> to vector<32xf32>
    %37 = vector.shape_cast %36 : vector<32xf32> to vector<1x32xf32>
    %38 = vector.broadcast %30 : vector<1x32xf32> to vector<32x32xf32>
    %39 = arith.mulf %10, %38 : vector<32x32xf32>
    %cst_15 = arith.constant dense<0.000000e+00> : vector<32xf32>
    %40 = vector.multi_reduction <add>, %39, %cst_15 [1] : vector<32x32xf32> to vector<32xf32>
    %41 = vector.shape_cast %40 : vector<32xf32> to vector<32x1xf32>
    %42 = vector.extract_strided_slice %14 {offsets = [1, 0], sizes = [1, 32], strides = [1, 1]} : vector<8x32xf32> to vector<1x32xf32>
    %43 = arith.addf %42, %37 : vector<1x32xf32>
    %44 = math.tanh %43 : vector<1x32xf32>
    %45 = vector.extract_strided_slice %17 {offsets = [0, 1], sizes = [32, 1], strides = [1, 1]} : vector<32x8xf32> to vector<32x1xf32>
    %46 = arith.addf %45, %41 : vector<32x1xf32>
    %47 = math.tanh %46 : vector<32x1xf32>
    %48 = vector.broadcast %47 : vector<32x1xf32> to vector<32x32xf32>
    %49 = arith.mulf %7, %48 : vector<32x32xf32>
    %cst_16 = arith.constant dense<0.000000e+00> : vector<32xf32>
    %50 = vector.multi_reduction <add>, %49, %cst_16 [0] : vector<32x32xf32> to vector<32xf32>
    %51 = vector.shape_cast %50 : vector<32xf32> to vector<1x32xf32>
    %52 = vector.broadcast %44 : vector<1x32xf32> to vector<32x32xf32>
    %53 = arith.mulf %10, %52 : vector<32x32xf32>
    %cst_17 = arith.constant dense<0.000000e+00> : vector<32xf32>
    %54 = vector.multi_reduction <add>, %53, %cst_17 [1] : vector<32x32xf32> to vector<32xf32>
    %55 = vector.shape_cast %54 : vector<32xf32> to vector<32x1xf32>
    %56 = vector.extract_strided_slice %14 {offsets = [2, 0], sizes = [1, 32], strides = [1, 1]} : vector<8x32xf32> to vector<1x32xf32>
    %57 = arith.addf %56, %51 : vector<1x32xf32>
    %58 = math.tanh %57 : vector<1x32xf32>
    %59 = vector.extract_strided_slice %17 {offsets = [0, 2], sizes = [32, 1], strides = [1, 1]} : vector<32x8xf32> to vector<32x1xf32>
    %60 = arith.addf %59, %55 : vector<32x1xf32>
    %61 = math.tanh %60 : vector<32x1xf32>
    %62 = vector.broadcast %61 : vector<32x1xf32> to vector<32x32xf32>
    %63 = arith.mulf %7, %62 : vector<32x32xf32>
    %cst_18 = arith.constant dense<0.000000e+00> : vector<32xf32>
    %64 = vector.multi_reduction <add>, %63, %cst_18 [0] : vector<32x32xf32> to vector<32xf32>
    %65 = vector.shape_cast %64 : vector<32xf32> to vector<1x32xf32>
    %66 = vector.broadcast %58 : vector<1x32xf32> to vector<32x32xf32>
    %67 = arith.mulf %10, %66 : vector<32x32xf32>
    %cst_19 = arith.constant dense<0.000000e+00> : vector<32xf32>
    %68 = vector.multi_reduction <add>, %67, %cst_19 [1] : vector<32x32xf32> to vector<32xf32>
    %69 = vector.shape_cast %68 : vector<32xf32> to vector<32x1xf32>
    %70 = vector.extract_strided_slice %14 {offsets = [3, 0], sizes = [1, 32], strides = [1, 1]} : vector<8x32xf32> to vector<1x32xf32>
    %71 = arith.addf %70, %65 : vector<1x32xf32>
    %72 = math.tanh %71 : vector<1x32xf32>
    %73 = vector.extract_strided_slice %17 {offsets = [0, 3], sizes = [32, 1], strides = [1, 1]} : vector<32x8xf32> to vector<32x1xf32>
    %74 = arith.addf %73, %69 : vector<32x1xf32>
    %75 = math.tanh %74 : vector<32x1xf32>
    %76 = vector.broadcast %75 : vector<32x1xf32> to vector<32x32xf32>
    %77 = arith.mulf %7, %76 : vector<32x32xf32>
    %cst_20 = arith.constant dense<0.000000e+00> : vector<32xf32>
    %78 = vector.multi_reduction <add>, %77, %cst_20 [0] : vector<32x32xf32> to vector<32xf32>
    %79 = vector.shape_cast %78 : vector<32xf32> to vector<1x32xf32>
    %80 = vector.broadcast %72 : vector<1x32xf32> to vector<32x32xf32>
    %81 = arith.mulf %10, %80 : vector<32x32xf32>
    %cst_21 = arith.constant dense<0.000000e+00> : vector<32xf32>
    %82 = vector.multi_reduction <add>, %81, %cst_21 [1] : vector<32x32xf32> to vector<32xf32>
    %83 = vector.shape_cast %82 : vector<32xf32> to vector<32x1xf32>
    %84 = vector.extract_strided_slice %14 {offsets = [4, 0], sizes = [1, 32], strides = [1, 1]} : vector<8x32xf32> to vector<1x32xf32>
    %85 = arith.addf %84, %79 : vector<1x32xf32>
    %86 = math.tanh %85 : vector<1x32xf32>
    %87 = vector.extract_strided_slice %17 {offsets = [0, 4], sizes = [32, 1], strides = [1, 1]} : vector<32x8xf32> to vector<32x1xf32>
    %88 = arith.addf %87, %83 : vector<32x1xf32>
    %89 = math.tanh %88 : vector<32x1xf32>
    %90 = vector.broadcast %89 : vector<32x1xf32> to vector<32x32xf32>
    %91 = arith.mulf %7, %90 : vector<32x32xf32>
    %cst_22 = arith.constant dense<0.000000e+00> : vector<32xf32>
    %92 = vector.multi_reduction <add>, %91, %cst_22 [0] : vector<32x32xf32> to vector<32xf32>
    %93 = vector.shape_cast %92 : vector<32xf32> to vector<1x32xf32>
    %94 = vector.broadcast %86 : vector<1x32xf32> to vector<32x32xf32>
    %95 = arith.mulf %10, %94 : vector<32x32xf32>
    %cst_23 = arith.constant dense<0.000000e+00> : vector<32xf32>
    %96 = vector.multi_reduction <add>, %95, %cst_23 [1] : vector<32x32xf32> to vector<32xf32>
    %97 = vector.shape_cast %96 : vector<32xf32> to vector<32x1xf32>
    %98 = vector.extract_strided_slice %14 {offsets = [5, 0], sizes = [1, 32], strides = [1, 1]} : vector<8x32xf32> to vector<1x32xf32>
    %99 = arith.addf %98, %93 : vector<1x32xf32>
    %100 = math.tanh %99 : vector<1x32xf32>
    %101 = vector.extract_strided_slice %17 {offsets = [0, 5], sizes = [32, 1], strides = [1, 1]} : vector<32x8xf32> to vector<32x1xf32>
    %102 = arith.addf %101, %97 : vector<32x1xf32>
    %103 = math.tanh %102 : vector<32x1xf32>
    %104 = vector.broadcast %103 : vector<32x1xf32> to vector<32x32xf32>
    %105 = arith.mulf %7, %104 : vector<32x32xf32>
    %cst_24 = arith.constant dense<0.000000e+00> : vector<32xf32>
    %106 = vector.multi_reduction <add>, %105, %cst_24 [0] : vector<32x32xf32> to vector<32xf32>
    %107 = vector.shape_cast %106 : vector<32xf32> to vector<1x32xf32>
    %108 = vector.broadcast %100 : vector<1x32xf32> to vector<32x32xf32>
    %109 = arith.mulf %10, %108 : vector<32x32xf32>
    %cst_25 = arith.constant dense<0.000000e+00> : vector<32xf32>
    %110 = vector.multi_reduction <add>, %109, %cst_25 [1] : vector<32x32xf32> to vector<32xf32>
    %111 = vector.shape_cast %110 : vector<32xf32> to vector<32x1xf32>
    %112 = vector.extract_strided_slice %14 {offsets = [6, 0], sizes = [1, 32], strides = [1, 1]} : vector<8x32xf32> to vector<1x32xf32>
    %113 = arith.addf %112, %107 : vector<1x32xf32>
    %114 = math.tanh %113 : vector<1x32xf32>
    %115 = vector.extract_strided_slice %17 {offsets = [0, 6], sizes = [32, 1], strides = [1, 1]} : vector<32x8xf32> to vector<32x1xf32>
    %116 = arith.addf %115, %111 : vector<32x1xf32>
    %117 = math.tanh %116 : vector<32x1xf32>
    %118 = vector.broadcast %117 : vector<32x1xf32> to vector<32x32xf32>
    %119 = arith.mulf %7, %118 : vector<32x32xf32>
    %cst_26 = arith.constant dense<0.000000e+00> : vector<32xf32>
    %120 = vector.multi_reduction <add>, %119, %cst_26 [0] : vector<32x32xf32> to vector<32xf32>
    %121 = vector.shape_cast %120 : vector<32xf32> to vector<1x32xf32>
    %122 = vector.broadcast %114 : vector<1x32xf32> to vector<32x32xf32>
    %123 = arith.mulf %10, %122 : vector<32x32xf32>
    %cst_27 = arith.constant dense<0.000000e+00> : vector<32xf32>
    %124 = vector.multi_reduction <add>, %123, %cst_27 [1] : vector<32x32xf32> to vector<32xf32>
    %125 = vector.shape_cast %124 : vector<32xf32> to vector<32x1xf32>
    %126 = vector.extract_strided_slice %14 {offsets = [7, 0], sizes = [1, 32], strides = [1, 1]} : vector<8x32xf32> to vector<1x32xf32>
    %127 = arith.addf %126, %121 : vector<1x32xf32>
    %128 = math.tanh %127 : vector<1x32xf32>
    %129 = vector.extract_strided_slice %17 {offsets = [0, 7], sizes = [32, 1], strides = [1, 1]} : vector<32x8xf32> to vector<32x1xf32>
    %130 = arith.addf %129, %125 : vector<32x1xf32>
    %131 = math.tanh %130 : vector<32x1xf32>
    %132 = tpu.concatenate %30, %44, %58, %72, %86, %100, %114, %128 in 0 : vector<1x32xf32>, vector<1x32xf32>, vector<1x32xf32>, vector<1x32xf32>, vector<1x32xf32>, vector<1x32xf32>, vector<1x32xf32>, vector<1x32xf32> -> vector<8x32xf32>
    %133 = tpu.concatenate %33, %47, %61, %75, %89, %103, %117, %131 in 1 : vector<32x1xf32>, vector<32x1xf32>, vector<32x1xf32>, vector<32x1xf32>, vector<32x1xf32>, vector<32x1xf32>, vector<32x1xf32>, vector<32x1xf32> -> vector<32x8xf32>
    %c1 = arith.constant 1 : index
    %c0_28 = arith.constant 0 : index
    %c0_29 = arith.constant 0 : index
    %134 = vector.load %arg2[%c1, %c0_28, %c0_29] : memref<2x65x32xf32, #tpu.memory_space<vmem>>, vector<1x65x32xf32>
    %135 = vector.shape_cast %134 : vector<1x65x32xf32> to vector<65x32xf32>
    %c1_30 = arith.constant 1 : index
    %c0_31 = arith.constant 0 : index
    %c0_32 = arith.constant 0 : index
    %136 = vector.load %arg3[%c1_30, %c0_31, %c0_32] : memref<2x32x65xf32, #tpu.memory_space<vmem>>, vector<1x32x65xf32>
    %137 = vector.shape_cast %136 : vector<1x32x65xf32> to vector<32x65xf32>
    %138 = vector.extract_strided_slice %135 {offsets = [0, 0], sizes = [32, 32], strides = [1, 1]} : vector<65x32xf32> to vector<32x32xf32>
    %139 = vector.extract_strided_slice %135 {offsets = [32, 0], sizes = [32, 32], strides = [1, 1]} : vector<65x32xf32> to vector<32x32xf32>
    %140 = vector.extract_strided_slice %135 {offsets = [64, 0], sizes = [1, 32], strides = [1, 1]} : vector<65x32xf32> to vector<1x32xf32>
    %141 = vector.extract_strided_slice %137 {offsets = [0, 0], sizes = [32, 32], strides = [1, 1]} : vector<32x65xf32> to vector<32x32xf32>
    %142 = vector.extract_strided_slice %137 {offsets = [0, 32], sizes = [32, 32], strides = [1, 1]} : vector<32x65xf32> to vector<32x32xf32>
    %143 = vector.extract_strided_slice %137 {offsets = [0, 64], sizes = [32, 1], strides = [1, 1]} : vector<32x65xf32> to vector<32x1xf32>
    %cst_33 = arith.constant dense<0.000000e+00> : vector<8x32xf32>
    %144 = tpu.matmul %132, %138, %cst_33 {dimension_numbers = #tpu.dot_dimension_numbers<[1], [0], [0], [1], [0, 0, 1, 1], [], []>} : vector<8x32xf32>, vector<32x32xf32>, vector<8x32xf32> -> vector<8x32xf32>
    %145 = vector.broadcast %140 : vector<1x32xf32> to vector<8x32xf32>
    %146 = arith.addf %144, %145 : vector<8x32xf32>
    %cst_34 = arith.constant dense<0.000000e+00> : vector<32x8xf32>
    %147 = tpu.matmul %141, %133, %cst_34 {dimension_numbers = #tpu.dot_dimension_numbers<[1], [0], [0], [1], [0, 0, 1, 1], [], []>} : vector<32x32xf32>, vector<32x8xf32>, vector<32x8xf32> -> vector<32x8xf32>
    %148 = vector.broadcast %143 : vector<32x1xf32> to vector<32x8xf32>
    %149 = arith.addf %147, %148 : vector<32x8xf32>
    %cst_35 = arith.constant 0.000000e+00 : f32
    %150 = vector.broadcast %cst_35 : f32 to vector<1x32xf32>
    %cst_36 = arith.constant 0.000000e+00 : f32
    %151 = vector.broadcast %cst_36 : f32 to vector<32x1xf32>
    %152 = vector.broadcast %151 : vector<32x1xf32> to vector<32x32xf32>
    %153 = arith.mulf %139, %152 : vector<32x32xf32>
    %cst_37 = arith.constant dense<0.000000e+00> : vector<32xf32>
    %154 = vector.multi_reduction <add>, %153, %cst_37 [0] : vector<32x32xf32> to vector<32xf32>
    %155 = vector.shape_cast %154 : vector<32xf32> to vector<1x32xf32>
    %156 = vector.broadcast %150 : vector<1x32xf32> to vector<32x32xf32>
    %157 = arith.mulf %142, %156 : vector<32x32xf32>
    %cst_38 = arith.constant dense<0.000000e+00> : vector<32xf32>
    %158 = vector.multi_reduction <add>, %157, %cst_38 [1] : vector<32x32xf32> to vector<32xf32>
    %159 = vector.shape_cast %158 : vector<32xf32> to vector<32x1xf32>
    %160 = vector.extract_strided_slice %146 {offsets = [0, 0], sizes = [1, 32], strides = [1, 1]} : vector<8x32xf32> to vector<1x32xf32>
    %161 = arith.addf %160, %155 : vector<1x32xf32>
    %162 = math.tanh %161 : vector<1x32xf32>
    %163 = vector.extract_strided_slice %149 {offsets = [0, 0], sizes = [32, 1], strides = [1, 1]} : vector<32x8xf32> to vector<32x1xf32>
    %164 = arith.addf %163, %159 : vector<32x1xf32>
    %165 = math.tanh %164 : vector<32x1xf32>
    %166 = vector.broadcast %165 : vector<32x1xf32> to vector<32x32xf32>
    %167 = arith.mulf %139, %166 : vector<32x32xf32>
    %cst_39 = arith.constant dense<0.000000e+00> : vector<32xf32>
    %168 = vector.multi_reduction <add>, %167, %cst_39 [0] : vector<32x32xf32> to vector<32xf32>
    %169 = vector.shape_cast %168 : vector<32xf32> to vector<1x32xf32>
    %170 = vector.broadcast %162 : vector<1x32xf32> to vector<32x32xf32>
    %171 = arith.mulf %142, %170 : vector<32x32xf32>
    %cst_40 = arith.constant dense<0.000000e+00> : vector<32xf32>
    %172 = vector.multi_reduction <add>, %171, %cst_40 [1] : vector<32x32xf32> to vector<32xf32>
    %173 = vector.shape_cast %172 : vector<32xf32> to vector<32x1xf32>
    %174 = vector.extract_strided_slice %146 {offsets = [1, 0], sizes = [1, 32], strides = [1, 1]} : vector<8x32xf32> to vector<1x32xf32>
    %175 = arith.addf %174, %169 : vector<1x32xf32>
    %176 = math.tanh %175 : vector<1x32xf32>
    %177 = vector.extract_strided_slice %149 {offsets = [0, 1], sizes = [32, 1], strides = [1, 1]} : vector<32x8xf32> to vector<32x1xf32>
    %178 = arith.addf %177, %173 : vector<32x1xf32>
    %179 = math.tanh %178 : vector<32x1xf32>
    %180 = vector.broadcast %179 : vector<32x1xf32> to vector<32x32xf32>
    %181 = arith.mulf %139, %180 : vector<32x32xf32>
    %cst_41 = arith.constant dense<0.000000e+00> : vector<32xf32>
    %182 = vector.multi_reduction <add>, %181, %cst_41 [0] : vector<32x32xf32> to vector<32xf32>
    %183 = vector.shape_cast %182 : vector<32xf32> to vector<1x32xf32>
    %184 = vector.broadcast %176 : vector<1x32xf32> to vector<32x32xf32>
    %185 = arith.mulf %142, %184 : vector<32x32xf32>
    %cst_42 = arith.constant dense<0.000000e+00> : vector<32xf32>
    %186 = vector.multi_reduction <add>, %185, %cst_42 [1] : vector<32x32xf32> to vector<32xf32>
    %187 = vector.shape_cast %186 : vector<32xf32> to vector<32x1xf32>
    %188 = vector.extract_strided_slice %146 {offsets = [2, 0], sizes = [1, 32], strides = [1, 1]} : vector<8x32xf32> to vector<1x32xf32>
    %189 = arith.addf %188, %183 : vector<1x32xf32>
    %190 = math.tanh %189 : vector<1x32xf32>
    %191 = vector.extract_strided_slice %149 {offsets = [0, 2], sizes = [32, 1], strides = [1, 1]} : vector<32x8xf32> to vector<32x1xf32>
    %192 = arith.addf %191, %187 : vector<32x1xf32>
    %193 = math.tanh %192 : vector<32x1xf32>
    %194 = vector.broadcast %193 : vector<32x1xf32> to vector<32x32xf32>
    %195 = arith.mulf %139, %194 : vector<32x32xf32>
    %cst_43 = arith.constant dense<0.000000e+00> : vector<32xf32>
    %196 = vector.multi_reduction <add>, %195, %cst_43 [0] : vector<32x32xf32> to vector<32xf32>
    %197 = vector.shape_cast %196 : vector<32xf32> to vector<1x32xf32>
    %198 = vector.broadcast %190 : vector<1x32xf32> to vector<32x32xf32>
    %199 = arith.mulf %142, %198 : vector<32x32xf32>
    %cst_44 = arith.constant dense<0.000000e+00> : vector<32xf32>
    %200 = vector.multi_reduction <add>, %199, %cst_44 [1] : vector<32x32xf32> to vector<32xf32>
    %201 = vector.shape_cast %200 : vector<32xf32> to vector<32x1xf32>
    %202 = vector.extract_strided_slice %146 {offsets = [3, 0], sizes = [1, 32], strides = [1, 1]} : vector<8x32xf32> to vector<1x32xf32>
    %203 = arith.addf %202, %197 : vector<1x32xf32>
    %204 = math.tanh %203 : vector<1x32xf32>
    %205 = vector.extract_strided_slice %149 {offsets = [0, 3], sizes = [32, 1], strides = [1, 1]} : vector<32x8xf32> to vector<32x1xf32>
    %206 = arith.addf %205, %201 : vector<32x1xf32>
    %207 = math.tanh %206 : vector<32x1xf32>
    %208 = vector.broadcast %207 : vector<32x1xf32> to vector<32x32xf32>
    %209 = arith.mulf %139, %208 : vector<32x32xf32>
    %cst_45 = arith.constant dense<0.000000e+00> : vector<32xf32>
    %210 = vector.multi_reduction <add>, %209, %cst_45 [0] : vector<32x32xf32> to vector<32xf32>
    %211 = vector.shape_cast %210 : vector<32xf32> to vector<1x32xf32>
    %212 = vector.broadcast %204 : vector<1x32xf32> to vector<32x32xf32>
    %213 = arith.mulf %142, %212 : vector<32x32xf32>
    %cst_46 = arith.constant dense<0.000000e+00> : vector<32xf32>
    %214 = vector.multi_reduction <add>, %213, %cst_46 [1] : vector<32x32xf32> to vector<32xf32>
    %215 = vector.shape_cast %214 : vector<32xf32> to vector<32x1xf32>
    %216 = vector.extract_strided_slice %146 {offsets = [4, 0], sizes = [1, 32], strides = [1, 1]} : vector<8x32xf32> to vector<1x32xf32>
    %217 = arith.addf %216, %211 : vector<1x32xf32>
    %218 = math.tanh %217 : vector<1x32xf32>
    %219 = vector.extract_strided_slice %149 {offsets = [0, 4], sizes = [32, 1], strides = [1, 1]} : vector<32x8xf32> to vector<32x1xf32>
    %220 = arith.addf %219, %215 : vector<32x1xf32>
    %221 = math.tanh %220 : vector<32x1xf32>
    %222 = vector.broadcast %221 : vector<32x1xf32> to vector<32x32xf32>
    %223 = arith.mulf %139, %222 : vector<32x32xf32>
    %cst_47 = arith.constant dense<0.000000e+00> : vector<32xf32>
    %224 = vector.multi_reduction <add>, %223, %cst_47 [0] : vector<32x32xf32> to vector<32xf32>
    %225 = vector.shape_cast %224 : vector<32xf32> to vector<1x32xf32>
    %226 = vector.broadcast %218 : vector<1x32xf32> to vector<32x32xf32>
    %227 = arith.mulf %142, %226 : vector<32x32xf32>
    %cst_48 = arith.constant dense<0.000000e+00> : vector<32xf32>
    %228 = vector.multi_reduction <add>, %227, %cst_48 [1] : vector<32x32xf32> to vector<32xf32>
    %229 = vector.shape_cast %228 : vector<32xf32> to vector<32x1xf32>
    %230 = vector.extract_strided_slice %146 {offsets = [5, 0], sizes = [1, 32], strides = [1, 1]} : vector<8x32xf32> to vector<1x32xf32>
    %231 = arith.addf %230, %225 : vector<1x32xf32>
    %232 = math.tanh %231 : vector<1x32xf32>
    %233 = vector.extract_strided_slice %149 {offsets = [0, 5], sizes = [32, 1], strides = [1, 1]} : vector<32x8xf32> to vector<32x1xf32>
    %234 = arith.addf %233, %229 : vector<32x1xf32>
    %235 = math.tanh %234 : vector<32x1xf32>
    %236 = vector.broadcast %235 : vector<32x1xf32> to vector<32x32xf32>
    %237 = arith.mulf %139, %236 : vector<32x32xf32>
    %cst_49 = arith.constant dense<0.000000e+00> : vector<32xf32>
    %238 = vector.multi_reduction <add>, %237, %cst_49 [0] : vector<32x32xf32> to vector<32xf32>
    %239 = vector.shape_cast %238 : vector<32xf32> to vector<1x32xf32>
    %240 = vector.broadcast %232 : vector<1x32xf32> to vector<32x32xf32>
    %241 = arith.mulf %142, %240 : vector<32x32xf32>
    %cst_50 = arith.constant dense<0.000000e+00> : vector<32xf32>
    %242 = vector.multi_reduction <add>, %241, %cst_50 [1] : vector<32x32xf32> to vector<32xf32>
    %243 = vector.shape_cast %242 : vector<32xf32> to vector<32x1xf32>
    %244 = vector.extract_strided_slice %146 {offsets = [6, 0], sizes = [1, 32], strides = [1, 1]} : vector<8x32xf32> to vector<1x32xf32>
    %245 = arith.addf %244, %239 : vector<1x32xf32>
    %246 = math.tanh %245 : vector<1x32xf32>
    %247 = vector.extract_strided_slice %149 {offsets = [0, 6], sizes = [32, 1], strides = [1, 1]} : vector<32x8xf32> to vector<32x1xf32>
    %248 = arith.addf %247, %243 : vector<32x1xf32>
    %249 = math.tanh %248 : vector<32x1xf32>
    %250 = vector.broadcast %249 : vector<32x1xf32> to vector<32x32xf32>
    %251 = arith.mulf %139, %250 : vector<32x32xf32>
    %cst_51 = arith.constant dense<0.000000e+00> : vector<32xf32>
    %252 = vector.multi_reduction <add>, %251, %cst_51 [0] : vector<32x32xf32> to vector<32xf32>
    %253 = vector.shape_cast %252 : vector<32xf32> to vector<1x32xf32>
    %254 = vector.extract_strided_slice %146 {offsets = [7, 0], sizes = [1, 32], strides = [1, 1]} : vector<8x32xf32> to vector<1x32xf32>
    %255 = arith.addf %254, %253 : vector<1x32xf32>
    %256 = math.tanh %255 : vector<1x32xf32>
    %257 = tpu.concatenate %162, %176, %190, %204, %218, %232, %246, %256 in 0 : vector<1x32xf32>, vector<1x32xf32>, vector<1x32xf32>, vector<1x32xf32>, vector<1x32xf32>, vector<1x32xf32>, vector<1x32xf32>, vector<1x32xf32> -> vector<8x32xf32>
    %c0_52 = arith.constant 0 : index
    %c0_53 = arith.constant 0 : index
    %258 = vector.load %arg4[%c0_52, %c0_53] : memref<33x8xf32, #tpu.memory_space<vmem>>, vector<33x8xf32>
    %259 = vector.extract_strided_slice %258 {offsets = [0, 0], sizes = [32, 8], strides = [1, 1]} : vector<33x8xf32> to vector<32x8xf32>
    %260 = vector.extract_strided_slice %258 {offsets = [32, 0], sizes = [1, 8], strides = [1, 1]} : vector<33x8xf32> to vector<1x8xf32>
    %cst_54 = arith.constant 0.000000e+00 : f32
    %261 = vector.broadcast %cst_54 : f32 to vector<8x32xf32>
    %262 = arith.maximumf %257, %261 : vector<8x32xf32>
    %cst_55 = arith.constant dense<0.000000e+00> : vector<8x8xf32>
    %263 = tpu.matmul %262, %259, %cst_55 {dimension_numbers = #tpu.dot_dimension_numbers<[1], [0], [0], [1], [0, 0, 1, 1], [], []>} : vector<8x32xf32>, vector<32x8xf32>, vector<8x8xf32> -> vector<8x8xf32>
    %264 = vector.broadcast %260 : vector<1x8xf32> to vector<8x8xf32>
    %265 = arith.addf %263, %264 : vector<8x8xf32>
    %cst_56 = arith.constant dense<0xFF800000> : vector<8xf32>
    %266 = vector.multi_reduction <maximumf>, %265, %cst_56 [1] : vector<8x8xf32> to vector<8xf32>
    %267 = vector.shape_cast %266 : vector<8xf32> to vector<8x1xf32>
    %268 = vector.broadcast %267 : vector<8x1xf32> to vector<8x8xf32>
    %269 = arith.subf %265, %268 : vector<8x8xf32>
    %270 = math.exp %269 : vector<8x8xf32>
    %cst_57 = arith.constant dense<0.000000e+00> : vector<8xf32>
    %271 = vector.multi_reduction <add>, %270, %cst_57 [1] : vector<8x8xf32> to vector<8xf32>
    %272 = vector.shape_cast %271 : vector<8xf32> to vector<8x1xf32>
    %273 = math.log %272 : vector<8x1xf32>
    %274 = vector.broadcast %273 : vector<8x1xf32> to vector<8x8xf32>
    %275 = arith.subf %269, %274 : vector<8x8xf32>
    %c0_58 = arith.constant 0 : index
    %c0_59 = arith.constant 0 : index
    %276 = vector.load %arg5[%c0_58, %c0_59] : memref<8x8xf32, #tpu.memory_space<vmem>>, vector<8x8xf32>
    tpu.vector_store %arg5[%c0_58, %c0_59], %275 {strides = array<i32>} : memref<8x8xf32, #tpu.memory_space<vmem>>, vector<8x8xf32>,
    return
  }
}

</mosaic_0001>

<llo_original>
// kernel: rnn_forward.1
$region0: #{rnn_forward.1}
  #allocation0 [shape = 'u32[]', space=smem, size = 0x4, offset = 0x4, fixed_abs, tag = 'smem constant byte address 0x4 - core index']
  #allocation1 [shape = 'u32[72,128]{1,0:T(1,128)}', space=vmem, size = 0x9000, scoped, tag = 'internal scratch']
  %s0 = inlined_call_operand.vmem [shape: f32[8,32], index: 0, kind: input, shape index: {}]
  %s1 = inlined_call_operand.vmem [shape: f32[32,8], index: 1, kind: input, shape index: {}]
  %s2 = inlined_call_operand.vmem [shape: f32[2,65,32], index: 2, kind: input, shape index: {}]
  %s3 = inlined_call_operand.vmem [shape: f32[2,32,65], index: 3, kind: input, shape index: {}]
  %s4 = inlined_call_operand.vmem [shape: f32[33,8], index: 4, kind: input, shape index: {}]
  %s5 = inlined_call_operand.hbm [shape: f32[8,8], index: 5, kind: output, shape index: {}]
  %s6 = sld [smem:[#allocation0]]
  $region30: #{rnn_forward.1} parent=0
    _
  %s8 = ssub.s32 1, %s6
  %s9 = scalar_select 0, %s8, %s6
  $region1: #{rnn_forward.1} parent=0
    #allocation2 [shape = 'u8[4096]{0}', space=vmem, size = 0x1000, scoped, tag = 'output window, operand 0, single buffered']
    #allocation3 [shape = 's32[1]{0}', space=sflag, size = 0x4, scoped, tag = 'scoped memory for rnn_forward.1']
    %10 = vsyncpa [#allocation3], 0
    // Predicated region
    $region2: #{rnn_forward.1} parent=1 // pred_check
      _
    $region3: #{rnn_forward.1} parent=1 // pred_check_branch
      %12 = sbr.rel (0) target = $region5
    $region4: #{rnn_forward.1} parent=1 // pred_region
      _
    $region5: #{rnn_forward.1} parent=1 // pred_fallthru
      _
    // Predicated region
    $region6: #{rnn_forward.1} parent=1 // pred_check
      _
    $region7: #{rnn_forward.1} parent=1 // pred_check_branch
      %14 = sbr.rel (0) target = $region9
    $region8: #{rnn_forward.1} parent=1 // pred_region
      _
    $region9: #{rnn_forward.1} parent=1 // pred_fallthru
      _
    // Predicated region
    $region10: #{rnn_forward.1} parent=1 // pred_check
      _
    $region11: #{rnn_forward.1} parent=1 // pred_check_branch
      %16 = sbr.rel (0) target = $region13
    $region12: #{rnn_forward.1} parent=1 // pred_region
      _
    $region13: #{rnn_forward.1} parent=1 // pred_fallthru
      _
    // Predicated region
    $region14: #{rnn_forward.1} parent=1 // pred_check
      _
    $region15: #{rnn_forward.1} parent=1 // pred_check_branch
      %18 = sbr.rel (0) target = $region17
    $region16: #{rnn_forward.1} parent=1 // pred_region
      _
    $region17: #{rnn_forward.1} parent=1 // pred_fallthru
      _
    // Predicated region
    $region18: #{rnn_forward.1} parent=1 // pred_check
      _
    $region19: #{rnn_forward.1} parent=1 // pred_check_branch
      %20 = sbr.rel (0) target = $region21
    $region20: #{rnn_forward.1} parent=1 // pred_region
      _
    $region21: #{rnn_forward.1} parent=1 // pred_fallthru
      _
    %v21 = vld [vmem:[%s0] sm:$0xff]
    %v22 = vld [vmem:[%s1] sm:$0xff]
    %v23 = vld [vmem:[%s1 + $0x8] sm:$0xff]
    %v24 = vld [vmem:[%s1 + $0x10] sm:$0xff]
    %v25 = vld [vmem:[%s1 + $0x18] sm:$0xff]
    %v26 = vld [vmem:[%s2] sm:$0xff]
    %v27 = vld [vmem:[%s2 + $0x8] sm:$0xff]
    %v28 = vld [vmem:[%s2 + $0x10] sm:$0xff]
    %v29 = vld [vmem:[%s2 + $0x18] sm:$0xff]
    %v30 = vld [vmem:[%s2 + $0x20] sm:$0xff]
    %v31 = vld [vmem:[%s2 + $0x28] sm:$0xff]
    %v32 = vld [vmem:[%s2 + $0x30] sm:$0xff]
    %v33 = vld [vmem:[%s2 + $0x38] sm:$0xff]
    %v34 = vld [vmem:[%s2 + $0x40] sm:$0x1]
    %v35 = vld [vmem:[%s3] sm:$0xff]
    %v36 = vld [vmem:[%s3 + $0x8] sm:$0xff]
    %v37 = vld [vmem:[%s3 + $0x10] sm:$0xff]
    %v38 = vld [vmem:[%s3 + $0x18] sm:$0xff]
    %v39 = vperm.slane %v34, 0
    %vm40 = vcmask 261120
    %v42 = vsel %vm40, %v21, 0
    %44 = vmatpush.msra.mxu0 0.0
    %45 = vmatpush.msra.mxu0 0.0
    %46 = vmatpush.msra.mxu0 0.0
    %47 = vmatpush.msra.mxu0 0.0
    %48 = vmatpush.msra.mxu0 0.0
    %49 = vmatpush.msra.mxu0 0.0
    %50 = vmatpush.msra.mxu0 0.0
    %51 = vmatpush.msra.mxu0 0.0
    %52 = vmatpush.msra.mxu0 0.0
    %53 = vmatpush.msra.mxu0 0.0
    %54 = vmatpush.msra.mxu0 0.0
    %55 = vmatpush.msra.mxu0 0.0
    %56 = vmatpush.msra.mxu0 %v29
    %57 = vmatpush.msra.mxu0 %v28
    %58 = vmatpush.msra.mxu0 %v27
    %59 = vmatpush.msra.mxu0 %v26
    %60 = vmatmul.f32.gmra.mxu0 %v42
    %v61 = vpop.f32.mrf.mxu0
    %v62 = vadd.f32 %v39, %v61
    %63 = vdwg.mxu0
    %65 = vset.pattern.permute.xlu0 64
    %66 = vperm.xlu0 %65, %v35
    %v67 = vpop.permute.xlu0 %66
    %70 = vset.pattern.permute.xlu0 64
    %71 = vperm.xlu0 %70, %v36
    %v72 = vpop.permute.xlu0 %71
    %75 = vset.pattern.permute.xlu0 64
    %76 = vperm.xlu0 %75, %v37
    %v77 = vpop.permute.xlu0 %76
    %80 = vset.pattern.permute.xlu0 64
    %81 = vperm.xlu0 %80, %v38
    %v82 = vpop.permute.xlu0 %81
    %v84 = vsel %vm40, %v35, 0
    %v86 = vsel %vm40, %v36, 0
    %v88 = vsel %vm40, %v37, 0
    %v90 = vsel %vm40, %v38, 0
    %92 = vmatpush.msra.mxu0 0.0
    %93 = vmatpush.msra.mxu0 0.0
    %94 = vmatpush.msra.mxu0 0.0
    %95 = vmatpush.msra.mxu0 0.0
    %96 = vmatpush.msra.mxu0 0.0
    %97 = vmatpush.msra.mxu0 0.0
    %98 = vmatpush.msra.mxu0 0.0
    %99 = vmatpush.msra.mxu0 0.0
    %100 = vmatpush.msra.mxu0 0.0
    %101 = vmatpush.msra.mxu0 0.0
    %102 = vmatpush.msra.mxu0 0.0
    %103 = vmatpush.msra.mxu0 0.0
    %104 = vmatpush.msra.mxu0 %v25
    %105 = vmatpush.msra.mxu0 %v24
    %106 = vmatpush.msra.mxu0 %v23
    %107 = vmatpush.msra.mxu0 %v22
    %108 = vmatmul.f32.gmra.mxu0 %v84
    %v109 = vpop.f32.mrf.mxu0
    %v110 = vadd.f32 %v67, %v109
    %111 = vmatmul.f32.gmra.mxu0 %v86
    %v112 = vpop.f32.mrf.mxu0
    %v113 = vadd.f32 %v72, %v112
    %114 = vmatmul.f32.gmra.mxu0 %v88
    %v115 = vpop.f32.mrf.mxu0
    %v116 = vadd.f32 %v77, %v115
    %117 = vmatmul.f32.gmra.mxu0 %v90
    %v118 = vpop.f32.mrf.mxu0
    %v119 = vadd.f32 %v82, %v118
    %120 = vdwg.mxu0
    %v121 = vmul.f32 %v30, 0.0
    %v122 = vmul.f32 %v31, 0.0
    %v123 = vmul.f32 %v32, 0.0
    %v124 = vmul.f32 %v33, 0.0
    %v125 = vsel %vm40, %v121, 0.0
    %v126 = vsel %vm40, %v122, 0.0
    %v127 = vadd.f32 %v125, %v126
    %v128 = vsel %vm40, %v123, 0.0
    %v129 = vadd.f32 %v127, %v128
    %v130 = vsel %vm40, %v124, 0.0
    %v131 = vadd.f32 %v129, %v130
    %v132 = vrot.slane %v131, 4
    %v133 = vadd.f32 %v131, %v132
    %v134 = vrot.slane %v133, 2
    %v135 = vadd.f32 %v133, %v134
    %v136 = vrot.slane %v135, 1
    %v137 = vadd.f32 %v135, %v136
    %v138 = vmul.f32 %v35, 0.0
    %v139 = vmul.f32 %v36, 0.0
    %v140 = vmul.f32 %v37, 0.0
    %v141 = vmul.f32 %v38, 0.0
    %146 = vrot.lane.b32.xlu0 %v138, 96
    %v147 = vpop.permute.xlu0 %146
    %148 = vrot.lane.b32.xlu0 %v139, 96
    %v149 = vpop.permute.xlu0 %148
    %150 = vrot.lane.b32.xlu0 %v140, 96
    %v151 = vpop.permute.xlu0 %150
    %152 = vrot.lane.b32.xlu0 %v141, 96
    %v153 = vpop.permute.xlu0 %152
    %v158 = vsel %vm40, %v147, 0.0
    %159 = vadd.xlane.f32.xlu0 %v158
    %v160 = vpop.xlane.xlu0 %159
    %v161 = vsel %vm40, %v149, 0.0
    %162 = vadd.xlane.f32.xlu0 %v161
    %v163 = vpop.xlane.xlu0 %162
    %v164 = vsel %vm40, %v151, 0.0
    %165 = vadd.xlane.f32.xlu0 %v164
    %v166 = vpop.xlane.xlu0 %165
    %v167 = vsel %vm40, %v153, 0.0
    %168 = vadd.xlane.f32.xlu0 %v167
    %v169 = vpop.xlane.xlu0 %168
    %v170 = vadd.f32 %v62, %v137
    %v171 = vtanh.pop %v170
    %v172 = vadd.f32 %v110, %v160
    %v173 = vadd.f32 %v113, %v163
    %v174 = vadd.f32 %v116, %v166
    %v175 = vadd.f32 %v119, %v169
    %v176 = vtanh.pop %v172
    %v177 = vtanh.pop %v173
    %v178 = vtanh.pop %v174
    %v179 = vtanh.pop %v175
    %181 = vset.pattern.permute.xlu0 0
    %182 = vperm.xlu0 %181, %v176
    %v183 = vpop.permute.xlu0 %182
    %186 = vset.pattern.permute.xlu0 0
    %187 = vperm.xlu0 %186, %v177
    %v188 = vpop.permute.xlu0 %187
    %191 = vset.pattern.permute.xlu0 0
    %192 = vperm.xlu0 %191, %v178
    %v193 = vpop.permute.xlu0 %192
    %196 = vset.pattern.permute.xlu0 0
    %197 = vperm.xlu0 %196, %v179
    %v198 = vpop.permute.xlu0 %197
    %v200 = vmul.f32 %v30, %v183
    %v201 = vmul.f32 %v31, %v188
    %v202 = vmul.f32 %v32, %v193
    %v203 = vmul.f32 %v33, %v198
    %v204 = vsel %vm40, %v200, 0.0
    %v205 = vsel %vm40, %v201, 0.0
    %v206 = vadd.f32 %v204, %v205
    %v207 = vsel %vm40, %v202, 0.0
    %v208 = vadd.f32 %v206, %v207
    %v209 = vsel %vm40, %v203, 0.0
    %v210 = vadd.f32 %v208, %v209
    %v211 = vrot.slane %v210, 4
    %v212 = vadd.f32 %v210, %v211
    %v213 = vrot.slane %v212, 2
    %v214 = vadd.f32 %v212, %v213
    %v215 = vrot.slane %v214, 1
    %v216 = vadd.f32 %v214, %v215
    %v217 = vperm.slane %v171, 0
    %219 = vrot.lane.b32.xlu0 %v217, 32
    %v220 = vpop.permute.xlu0 %219
    %v222 = vmul.f32 %v35, %v220
    %v223 = vmul.f32 %v36, %v220
    %v224 = vmul.f32 %v37, %v220
    %v225 = vmul.f32 %v38, %v220
    %230 = vrot.lane.b32.xlu0 %v222, 96
    %v231 = vpop.permute.xlu0 %230
    %232 = vrot.lane.b32.xlu0 %v223, 96
    %v233 = vpop.permute.xlu0 %232
    %234 = vrot.lane.b32.xlu0 %v224, 96
    %v235 = vpop.permute.xlu0 %234
    %236 = vrot.lane.b32.xlu0 %v225, 96
    %v237 = vpop.permute.xlu0 %236
    %v242 = vsel %vm40, %v231, 0.0
    %243 = vadd.xlane.f32.xlu0 %v242
    %v244 = vpop.xlane.xlu0 %243
    %v245 = vsel %vm40, %v233, 0.0
    %246 = vadd.xlane.f32.xlu0 %v245
    %v247 = vpop.xlane.xlu0 %246
    %v248 = vsel %vm40, %v235, 0.0
    %249 = vadd.xlane.f32.xlu0 %v248
    %v250 = vpop.xlane.xlu0 %249
    %v251 = vsel %vm40, %v237, 0.0
    %252 = vadd.xlane.f32.xlu0 %v251
    %v253 = vpop.xlane.xlu0 %252
    %v254 = vadd.f32 %v62, %v216
    %v255 = vtanh.pop %v254
    %v256 = vadd.f32 %v110, %v244
    %v257 = vadd.f32 %v113, %v247
    %v258 = vadd.f32 %v116, %v250
    %v259 = vadd.f32 %v119, %v253
    %v260 = vtanh.pop %v256
    %v261 = vtanh.pop %v257
    %v262 = vtanh.pop %v258
    %v263 = vtanh.pop %v259
    %265 = vset.pattern.permute.xlu0 1
    %266 = vperm.xlu0 %265, %v260
    %v267 = vpop.permute.xlu0 %266
    %270 = vset.pattern.permute.xlu0 1
    %271 = vperm.xlu0 %270, %v261
    %v272 = vpop.permute.xlu0 %271
    %275 = vset.pattern.permute.xlu0 1
    %276 = vperm.xlu0 %275, %v262
    %v277 = vpop.permute.xlu0 %276
    %280 = vset.pattern.permute.xlu0 1
    %281 = vperm.xlu0 %280, %v263
    %v282 = vpop.permute.xlu0 %281
    %v284 = vmul.f32 %v30, %v267
    %v285 = vmul.f32 %v31, %v272
    %v286 = vmul.f32 %v32, %v277
    %v287 = vmul.f32 %v33, %v282
    %v288 = vsel %vm40, %v284, 0.0
    %v289 = vsel %vm40, %v285, 0.0
    %v290 = vadd.f32 %v288, %v289
    %v291 = vsel %vm40, %v286, 0.0
    %v292 = vadd.f32 %v290, %v291
    %v293 = vsel %vm40, %v287, 0.0
    %v294 = vadd.f32 %v292, %v293
    %v295 = vrot.slane %v294, 4
    %v296 = vadd.f32 %v294, %v295
    %v297 = vrot.slane %v296, 2
    %v298 = vadd.f32 %v296, %v297
    %v299 = vrot.slane %v298, 1
    %v300 = vadd.f32 %v298, %v299
    %v301 = vperm.slane %v255, 1
    %303 = vrot.lane.b32.xlu0 %v301, 32
    %v304 = vpop.permute.xlu0 %303
    %v306 = vmul.f32 %v35, %v304
    %v307 = vmul.f32 %v36, %v304
    %v308 = vmul.f32 %v37, %v304
    %v309 = vmul.f32 %v38, %v304
    %314 = vrot.lane.b32.xlu0 %v306, 96
    %v315 = vpop.permute.xlu0 %314
    %316 = vrot.lane.b32.xlu0 %v307, 96
    %v317 = vpop.permute.xlu0 %316
    %318 = vrot.lane.b32.xlu0 %v308, 96
    %v319 = vpop.permute.xlu0 %318
    %320 = vrot.lane.b32.xlu0 %v309, 96
    %v321 = vpop.permute.xlu0 %320
    %v326 = vsel %vm40, %v315, 0.0
    %327 = vadd.xlane.f32.xlu0 %v326
    %v328 = vpop.xlane.xlu0 %327
    %v329 = vsel %vm40, %v317, 0.0
    %330 = vadd.xlane.f32.xlu0 %v329
    %v331 = vpop.xlane.xlu0 %330
    %v332 = vsel %vm40, %v319, 0.0
    %333 = vadd.xlane.f32.xlu0 %v332
    %v334 = vpop.xlane.xlu0 %333
    %v335 = vsel %vm40, %v321, 0.0
    %336 = vadd.xlane.f32.xlu0 %v335
    %v337 = vpop.xlane.xlu0 %336
    %v338 = vadd.f32 %v62, %v300
    %v339 = vtanh.pop %v338
    %v340 = vadd.f32 %v110, %v328
    %v341 = vadd.f32 %v113, %v331
    %v342 = vadd.f32 %v116, %v334
    %v343 = vadd.f32 %v119, %v337
    %v344 = vtanh.pop %v340
    %v345 = vtanh.pop %v341
    %v346 = vtanh.pop %v342
    %v347 = vtanh.pop %v343
    %349 = vset.pattern.permute.xlu0 2
    %350 = vperm.xlu0 %349, %v344
    %v351 = vpop.permute.xlu0 %350
    %354 = vset.pattern.permute.xlu0 2
    %355 = vperm.xlu0 %354, %v345
    %v356 = vpop.permute.xlu0 %355
    %359 = vset.pattern.permute.xlu0 2
    %360 = vperm.xlu0 %359, %v346
    %v361 = vpop.permute.xlu0 %360
    %364 = vset.pattern.permute.xlu0 2
    %365 = vperm.xlu0 %364, %v347
    %v366 = vpop.permute.xlu0 %365
    %v368 = vmul.f32 %v30, %v351
    %v369 = vmul.f32 %v31, %v356
    %v370 = vmul.f32 %v32, %v361
    %v371 = vmul.f32 %v33, %v366
    %v372 = vsel %vm40, %v368, 0.0
    %v373 = vsel %vm40, %v369, 0.0
    %v374 = vadd.f32 %v372, %v373
    %v375 = vsel %vm40, %v370, 0.0
    %v376 = vadd.f32 %v374, %v375
    %v377 = vsel %vm40, %v371, 0.0
    %v378 = vadd.f32 %v376, %v377
    %v379 = vrot.slane %v378, 4
    %v380 = vadd.f32 %v378, %v379
    %v381 = vrot.slane %v380, 2
    %v382 = vadd.f32 %v380, %v381
    %v383 = vrot.slane %v382, 1
    %v384 = vadd.f32 %v382, %v383
    %v385 = vperm.slane %v339, 2
    %387 = vrot.lane.b32.xlu0 %v385, 32
    %v388 = vpop.permute.xlu0 %387
    %v390 = vmul.f32 %v35, %v388
    %v391 = vmul.f32 %v36, %v388
    %v392 = vmul.f32 %v37, %v388
    %v393 = vmul.f32 %v38, %v388
    %398 = vrot.lane.b32.xlu0 %v390, 96
    %v399 = vpop.permute.xlu0 %398
    %400 = vrot.lane.b32.xlu0 %v391, 96
    %v401 = vpop.permute.xlu0 %400
    %402 = vrot.lane.b32.xlu0 %v392, 96
    %v403 = vpop.permute.xlu0 %402
    %404 = vrot.lane.b32.xlu0 %v393, 96
    %v405 = vpop.permute.xlu0 %404
    %v410 = vsel %vm40, %v399, 0.0
    %411 = vadd.xlane.f32.xlu0 %v410
    %v412 = vpop.xlane.xlu0 %411
    %v413 = vsel %vm40, %v401, 0.0
    %414 = vadd.xlane.f32.xlu0 %v413
    %v415 = vpop.xlane.xlu0 %414
    %v416 = vsel %vm40, %v403, 0.0
    %417 = vadd.xlane.f32.xlu0 %v416
    %v418 = vpop.xlane.xlu0 %417
    %v419 = vsel %vm40, %v405, 0.0
    %420 = vadd.xlane.f32.xlu0 %v419
    %v421 = vpop.xlane.xlu0 %420
    %v422 = vadd.f32 %v62, %v384
    %v423 = vtanh.pop %v422
    %v424 = vadd.f32 %v110, %v412
    %v425 = vadd.f32 %v113, %v415
    %v426 = vadd.f32 %v116, %v418
    %v427 = vadd.f32 %v119, %v421
    %v428 = vtanh.pop %v424
    %v429 = vtanh.pop %v425
    %v430 = vtanh.pop %v426
    %v431 = vtanh.pop %v427
    %433 = vset.pattern.permute.xlu0 3
    %434 = vperm.xlu0 %433, %v428
    %v435 = vpop.permute.xlu0 %434
    %438 = vset.pattern.permute.xlu0 3
    %439 = vperm.xlu0 %438, %v429
    %v440 = vpop.permute.xlu0 %439
    %443 = vset.pattern.permute.xlu0 3
    %444 = vperm.xlu0 %443, %v430
    %v445 = vpop.permute.xlu0 %444
    %448 = vset.pattern.permute.xlu0 3
    %449 = vperm.xlu0 %448, %v431
    %v450 = vpop.permute.xlu0 %449
    %v452 = vmul.f32 %v30, %v435
    %v453 = vmul.f32 %v31, %v440
    %v454 = vmul.f32 %v32, %v445
    %v455 = vmul.f32 %v33, %v450
    %v456 = vsel %vm40, %v452, 0.0
    %v457 = vsel %vm40, %v453, 0.0
    %v458 = vadd.f32 %v456, %v457
    %v459 = vsel %vm40, %v454, 0.0
    %v460 = vadd.f32 %v458, %v459
    %v461 = vsel %vm40, %v455, 0.0
    %v462 = vadd.f32 %v460, %v461
    %v463 = vrot.slane %v462, 4
    %v464 = vadd.f32 %v462, %v463
    %v465 = vrot.slane %v464, 2
    %v466 = vadd.f32 %v464, %v465
    %v467 = vrot.slane %v466, 1
    %v468 = vadd.f32 %v466, %v467
    %v469 = vperm.slane %v423, 3
    %471 = vrot.lane.b32.xlu0 %v469, 32
    %v472 = vpop.permute.xlu0 %471
    %v474 = vmul.f32 %v35, %v472
    %v475 = vmul.f32 %v36, %v472
    %v476 = vmul.f32 %v37, %v472
    %v477 = vmul.f32 %v38, %v472
    %482 = vrot.lane.b32.xlu0 %v474, 96
    %v483 = vpop.permute.xlu0 %482
    %484 = vrot.lane.b32.xlu0 %v475, 96
    %v485 = vpop.permute.xlu0 %484
    %486 = vrot.lane.b32.xlu0 %v476, 96
    %v487 = vpop.permute.xlu0 %486
    %488 = vrot.lane.b32.xlu0 %v477, 96
    %v489 = vpop.permute.xlu0 %488
    %v494 = vsel %vm40, %v483, 0.0
    %495 = vadd.xlane.f32.xlu0 %v494
    %v496 = vpop.xlane.xlu0 %495
    %v497 = vsel %vm40, %v485, 0.0
    %498 = vadd.xlane.f32.xlu0 %v497
    %v499 = vpop.xlane.xlu0 %498
    %v500 = vsel %vm40, %v487, 0.0
    %501 = vadd.xlane.f32.xlu0 %v500
    %v502 = vpop.xlane.xlu0 %501
    %v503 = vsel %vm40, %v489, 0.0
    %504 = vadd.xlane.f32.xlu0 %v503
    %v505 = vpop.xlane.xlu0 %504
    %v506 = vadd.f32 %v62, %v468
    %v507 = vtanh.pop %v506
    %v508 = vadd.f32 %v110, %v496
    %v509 = vadd.f32 %v113, %v499
    %v510 = vadd.f32 %v116, %v502
    %v511 = vadd.f32 %v119, %v505
    %v512 = vtanh.pop %v508
    %v513 = vtanh.pop %v509
    %v514 = vtanh.pop %v510
    %v515 = vtanh.pop %v511
    %517 = vset.pattern.permute.xlu0 4
    %518 = vperm.xlu0 %517, %v512
    %v519 = vpop.permute.xlu0 %518
    %522 = vset.pattern.permute.xlu0 4
    %523 = vperm.xlu0 %522, %v513
    %v524 = vpop.permute.xlu0 %523
    %527 = vset.pattern.permute.xlu0 4
    %528 = vperm.xlu0 %527, %v514
    %v529 = vpop.permute.xlu0 %528
    %532 = vset.pattern.permute.xlu0 4
    %533 = vperm.xlu0 %532, %v515
    %v534 = vpop.permute.xlu0 %533
    %v536 = vmul.f32 %v30, %v519
    %v537 = vmul.f32 %v31, %v524
    %v538 = vmul.f32 %v32, %v529
    %v539 = vmul.f32 %v33, %v534
    %v540 = vsel %vm40, %v536, 0.0
    %v541 = vsel %vm40, %v537, 0.0
    %v542 = vadd.f32 %v540, %v541
    %v543 = vsel %vm40, %v538, 0.0
    %v544 = vadd.f32 %v542, %v543
    %v545 = vsel %vm40, %v539, 0.0
    %v546 = vadd.f32 %v544, %v545
    %v547 = vrot.slane %v546, 4
    %v548 = vadd.f32 %v546, %v547
    %v549 = vrot.slane %v548, 2
    %v550 = vadd.f32 %v548, %v549
    %v551 = vrot.slane %v550, 1
    %v552 = vadd.f32 %v550, %v551
    %v553 = vperm.slane %v507, 4
    %555 = vrot.lane.b32.xlu0 %v553, 32
    %v556 = vpop.permute.xlu0 %555
    %v558 = vmul.f32 %v35, %v556
    %v559 = vmul.f32 %v36, %v556
    %v560 = vmul.f32 %v37, %v556
    %v561 = vmul.f32 %v38, %v556
    %566 = vrot.lane.b32.xlu0 %v558, 96
    %v567 = vpop.permute.xlu0 %566
    %568 = vrot.lane.b32.xlu0 %v559, 96
    %v569 = vpop.permute.xlu0 %568
    %570 = vrot.lane.b32.xlu0 %v560, 96
    %v571 = vpop.permute.xlu0 %570
    %572 = vrot.lane.b32.xlu0 %v561, 96
    %v573 = vpop.permute.xlu0 %572
    %v578 = vsel %vm40, %v567, 0.0
    %579 = vadd.xlane.f32.xlu0 %v578
    %v580 = vpop.xlane.xlu0 %579
    %v581 = vsel %vm40, %v569, 0.0
    %582 = vadd.xlane.f32.xlu0 %v581
    %v583 = vpop.xlane.xlu0 %582
    %v584 = vsel %vm40, %v571, 0.0
    %585 = vadd.xlane.f32.xlu0 %v584
    %v586 = vpop.xlane.xlu0 %585
    %v587 = vsel %vm40, %v573, 0.0
    %588 = vadd.xlane.f32.xlu0 %v587
    %v589 = vpop.xlane.xlu0 %588
    %v590 = vadd.f32 %v62, %v552
    %v591 = vtanh.pop %v590
    %v592 = vadd.f32 %v110, %v580
    %v593 = vadd.f32 %v113, %v583
    %v594 = vadd.f32 %v116, %v586
    %v595 = vadd.f32 %v119, %v589
    %v596 = vtanh.pop %v592
    %v597 = vtanh.pop %v593
    %v598 = vtanh.pop %v594
    %v599 = vtanh.pop %v595
    %601 = vset.pattern.permute.xlu0 5
    %602 = vperm.xlu0 %601, %v596
    %v603 = vpop.permute.xlu0 %602
    %606 = vset.pattern.permute.xlu0 5
    %607 = vperm.xlu0 %606, %v597
    %v608 = vpop.permute.xlu0 %607
    %611 = vset.pattern.permute.xlu0 5
    %612 = vperm.xlu0 %611, %v598
    %v613 = vpop.permute.xlu0 %612
    %616 = vset.pattern.permute.xlu0 5
    %617 = vperm.xlu0 %616, %v599
    %v618 = vpop.permute.xlu0 %617
    %v620 = vmul.f32 %v30, %v603
    %v621 = vmul.f32 %v31, %v608
    %v622 = vmul.f32 %v32, %v613
    %v623 = vmul.f32 %v33, %v618
    %v624 = vsel %vm40, %v620, 0.0
    %v625 = vsel %vm40, %v621, 0.0
    %v626 = vadd.f32 %v624, %v625
    %v627 = vsel %vm40, %v622, 0.0
    %v628 = vadd.f32 %v626, %v627
    %v629 = vsel %vm40, %v623, 0.0
    %v630 = vadd.f32 %v628, %v629
    %v631 = vrot.slane %v630, 4
    %v632 = vadd.f32 %v630, %v631
    %v633 = vrot.slane %v632, 2
    %v634 = vadd.f32 %v632, %v633
    %v635 = vrot.slane %v634, 1
    %v636 = vadd.f32 %v634, %v635
    %v637 = vperm.slane %v591, 5
    %639 = vrot.lane.b32.xlu0 %v637, 32
    %v640 = vpop.permute.xlu0 %639
    %v642 = vmul.f32 %v35, %v640
    %v643 = vmul.f32 %v36, %v640
    %v644 = vmul.f32 %v37, %v640
    %v645 = vmul.f32 %v38, %v640
    %650 = vrot.lane.b32.xlu0 %v642, 96
    %v651 = vpop.permute.xlu0 %650
    %652 = vrot.lane.b32.xlu0 %v643, 96
    %v653 = vpop.permute.xlu0 %652
    %654 = vrot.lane.b32.xlu0 %v644, 96
    %v655 = vpop.permute.xlu0 %654
    %656 = vrot.lane.b32.xlu0 %v645, 96
    %v657 = vpop.permute.xlu0 %656
    %v662 = vsel %vm40, %v651, 0.0
    %663 = vadd.xlane.f32.xlu0 %v662
    %v664 = vpop.xlane.xlu0 %663
    %v665 = vsel %vm40, %v653, 0.0
    %666 = vadd.xlane.f32.xlu0 %v665
    %v667 = vpop.xlane.xlu0 %666
    %v668 = vsel %vm40, %v655, 0.0
    %669 = vadd.xlane.f32.xlu0 %v668
    %v670 = vpop.xlane.xlu0 %669
    %v671 = vsel %vm40, %v657, 0.0
    %672 = vadd.xlane.f32.xlu0 %v671
    %v673 = vpop.xlane.xlu0 %672
    %v674 = vadd.f32 %v62, %v636
    %v675 = vtanh.pop %v674
    %v676 = vadd.f32 %v110, %v664
    %v677 = vadd.f32 %v113, %v667
    %v678 = vadd.f32 %v116, %v670
    %v679 = vadd.f32 %v119, %v673
    %v680 = vtanh.pop %v676
    %v681 = vtanh.pop %v677
    %v682 = vtanh.pop %v678
    %v683 = vtanh.pop %v679
    %685 = vset.pattern.permute.xlu0 6
    %686 = vperm.xlu0 %685, %v680
    %v687 = vpop.permute.xlu0 %686
    %690 = vset.pattern.permute.xlu0 6
    %691 = vperm.xlu0 %690, %v681
    %v692 = vpop.permute.xlu0 %691
    %695 = vset.pattern.permute.xlu0 6
    %696 = vperm.xlu0 %695, %v682
    %v697 = vpop.permute.xlu0 %696
    %700 = vset.pattern.permute.xlu0 6
    %701 = vperm.xlu0 %700, %v683
    %v702 = vpop.permute.xlu0 %701
    %v704 = vmul.f32 %v30, %v687
    %v705 = vmul.f32 %v31, %v692
    %v706 = vmul.f32 %v32, %v697
    %v707 = vmul.f32 %v33, %v702
    %v708 = vsel %vm40, %v704, 0.0
    %v709 = vsel %vm40, %v705, 0.0
    %v710 = vadd.f32 %v708, %v709
    %v711 = vsel %vm40, %v706, 0.0
    %v712 = vadd.f32 %v710, %v711
    %v713 = vsel %vm40, %v707, 0.0
    %v714 = vadd.f32 %v712, %v713
    %v715 = vrot.slane %v714, 4
    %v716 = vadd.f32 %v714, %v715
    %v717 = vrot.slane %v716, 2
    %v718 = vadd.f32 %v716, %v717
    %v719 = vrot.slane %v718, 1
    %v720 = vadd.f32 %v718, %v719
    %v721 = vperm.slane %v675, 6
    %723 = vrot.lane.b32.xlu0 %v721, 32
    %v724 = vpop.permute.xlu0 %723
    %v726 = vmul.f32 %v35, %v724
    %v727 = vmul.f32 %v36, %v724
    %v728 = vmul.f32 %v37, %v724
    %v729 = vmul.f32 %v38, %v724
    %734 = vrot.lane.b32.xlu0 %v726, 96
    %v735 = vpop.permute.xlu0 %734
    %736 = vrot.lane.b32.xlu0 %v727, 96
    %v737 = vpop.permute.xlu0 %736
    %738 = vrot.lane.b32.xlu0 %v728, 96
    %v739 = vpop.permute.xlu0 %738
    %740 = vrot.lane.b32.xlu0 %v729, 96
    %v741 = vpop.permute.xlu0 %740
    %v746 = vsel %vm40, %v735, 0.0
    %747 = vadd.xlane.f32.xlu0 %v746
    %v748 = vpop.xlane.xlu0 %747
    %v749 = vsel %vm40, %v737, 0.0
    %750 = vadd.xlane.f32.xlu0 %v749
    %v751 = vpop.xlane.xlu0 %750
    %v752 = vsel %vm40, %v739, 0.0
    %753 = vadd.xlane.f32.xlu0 %v752
    %v754 = vpop.xlane.xlu0 %753
    %v755 = vsel %vm40, %v741, 0.0
    %756 = vadd.xlane.f32.xlu0 %v755
    %v757 = vpop.xlane.xlu0 %756
    %v758 = vadd.f32 %v62, %v720
    %v759 = vtanh.pop %v758
    %v760 = vadd.f32 %v110, %v748
    %v761 = vadd.f32 %v113, %v751
    %v762 = vadd.f32 %v116, %v754
    %v763 = vadd.f32 %v119, %v757
    %v764 = vtanh.pop %v760
    %v765 = vtanh.pop %v761
    %v766 = vtanh.pop %v762
    %v767 = vtanh.pop %v763
    %vm768 = vcmask 1040384
    %v769 = vsel %vm768, %v171, %v255
    %vm770 = vcmask 1041408
    %v771 = vsel %vm770, %v769, %v339
    %vm772 = vcmask 1042432
    %v773 = vsel %vm772, %v771, %v423
    %vm774 = vcmask 1043456
    %v775 = vsel %vm774, %v773, %v507
    %vm776 = vcmask 1044480
    %v777 = vsel %vm776, %v775, %v591
    %vm778 = vcmask 1045504
    %v779 = vsel %vm778, %v777, %v675
    %vm780 = vcmask 1046528
    %v781 = vsel %vm780, %v779, %v759
    %vm782 = vcmask 7168
    %v783 = vsel %vm782, %v176, %v260
    %v784 = vsel %vm782, %v177, %v261
    %v785 = vsel %vm782, %v178, %v262
    %v786 = vsel %vm782, %v179, %v263
    %vm787 = vcmask 15360
    %v788 = vsel %vm787, %v783, %v344
    %v789 = vsel %vm787, %v784, %v345
    %v790 = vsel %vm787, %v785, %v346
    %v791 = vsel %vm787, %v786, %v347
    %vm792 = vcmask 23552
    %v793 = vsel %vm792, %v788, %v428
    %v794 = vsel %vm792, %v789, %v429
    %v795 = vsel %vm792, %v790, %v430
    %v796 = vsel %vm792, %v791, %v431
    %vm797 = vcmask 31744
    %v798 = vsel %vm797, %v793, %v512
    %v799 = vsel %vm797, %v794, %v513
    %v800 = vsel %vm797, %v795, %v514
    %v801 = vsel %vm797, %v796, %v515
    %vm802 = vcmask 39936
    %v803 = vsel %vm802, %v798, %v596
    %v804 = vsel %vm802, %v799, %v597
    %v805 = vsel %vm802, %v800, %v598
    %v806 = vsel %vm802, %v801, %v599
    %vm807 = vcmask 48128
    %v808 = vsel %vm807, %v803, %v680
    %v809 = vsel %vm807, %v804, %v681
    %v810 = vsel %vm807, %v805, %v682
    %v811 = vsel %vm807, %v806, %v683
    %vm812 = vcmask 56320
    %v813 = vsel %vm812, %v808, %v764
    %v814 = vsel %vm812, %v809, %v765
    %v815 = vsel %vm812, %v810, %v766
    %v816 = vsel %vm812, %v811, %v767
    %s817 = scalar_lea.vmem %s2, 72
    %v818 = vld [vmem:[%s817] sm:$0xff]
    %v819 = vld [vmem:[%s817 + $0x8] sm:$0xff]
    %v820 = vld [vmem:[%s817 + $0x10] sm:$0xff]
    %v821 = vld [vmem:[%s817 + $0x18] sm:$0xff]
    %v822 = vld [vmem:[%s817 + $0x20] sm:$0xff]
    %v823 = vld [vmem:[%s817 + $0x28] sm:$0xff]
    %v824 = vld [vmem:[%s817 + $0x30] sm:$0xff]
    %v825 = vld [vmem:[%s817 + $0x38] sm:$0xff]
    %v826 = vld [vmem:[%s817 + $0x40] sm:$0x1]
    %s827 = scalar_lea.vmem %s3, 32
    %v828 = vld [vmem:[%s827] sm:$0xff]
    %v829 = vld [vmem:[%s827 + $0x8] sm:$0xff]
    %v830 = vld [vmem:[%s827 + $0x10] sm:$0xff]
    %v831 = vld [vmem:[%s827 + $0x18] sm:$0xff]
    %v832 = vperm.slane %v826, 0
    %v834 = vsel %vm40, %v781, 0
    %836 = vmatpush.msra.mxu0 0.0
    %837 = vmatpush.msra.mxu0 0.0
    %838 = vmatpush.msra.mxu0 0.0
    %839 = vmatpush.msra.mxu0 0.0
    %840 = vmatpush.msra.mxu0 0.0
    %841 = vmatpush.msra.mxu0 0.0
    %842 = vmatpush.msra.mxu0 0.0
    %843 = vmatpush.msra.mxu0 0.0
    %844 = vmatpush.msra.mxu0 0.0
    %845 = vmatpush.msra.mxu0 0.0
    %846 = vmatpush.msra.mxu0 0.0
    %847 = vmatpush.msra.mxu0 0.0
    %848 = vmatpush.msra.mxu0 %v821
    %849 = vmatpush.msra.mxu0 %v820
    %850 = vmatpush.msra.mxu0 %v819
    %851 = vmatpush.msra.mxu0 %v818
    %852 = vmatmul.f32.gmra.mxu0 %v834
    %v853 = vpop.f32.mrf.mxu0
    %v854 = vadd.f32 %v832, %v853
    %855 = vdwg.mxu0
    %857 = vset.pattern.permute.xlu0 64
    %858 = vperm.xlu0 %857, %v828
    %v859 = vpop.permute.xlu0 %858
    %862 = vset.pattern.permute.xlu0 64
    %863 = vperm.xlu0 %862, %v829
    %v864 = vpop.permute.xlu0 %863
    %867 = vset.pattern.permute.xlu0 64
    %868 = vperm.xlu0 %867, %v830
    %v869 = vpop.permute.xlu0 %868
    %872 = vset.pattern.permute.xlu0 64
    %873 = vperm.xlu0 %872, %v831
    %v874 = vpop.permute.xlu0 %873
    %v876 = vsel %vm40, %v828, 0
    %v878 = vsel %vm40, %v829, 0
    %v880 = vsel %vm40, %v830, 0
    %v882 = vsel %vm40, %v831, 0
    %884 = vmatpush.msra.mxu0 0.0
    %885 = vmatpush.msra.mxu0 0.0
    %886 = vmatpush.msra.mxu0 0.0
    %887 = vmatpush.msra.mxu0 0.0
    %888 = vmatpush.msra.mxu0 0.0
    %889 = vmatpush.msra.mxu0 0.0
    %890 = vmatpush.msra.mxu0 0.0
    %891 = vmatpush.msra.mxu0 0.0
    %892 = vmatpush.msra.mxu0 0.0
    %893 = vmatpush.msra.mxu0 0.0
    %894 = vmatpush.msra.mxu0 0.0
    %895 = vmatpush.msra.mxu0 0.0
    %896 = vmatpush.msra.mxu0 %v816
    %897 = vmatpush.msra.mxu0 %v815
    %898 = vmatpush.msra.mxu0 %v814
    %899 = vmatpush.msra.mxu0 %v813
    %900 = vmatmul.f32.gmra.mxu0 %v876
    %v901 = vpop.f32.mrf.mxu0
    %v902 = vadd.f32 %v859, %v901
    %903 = vmatmul.f32.gmra.mxu0 %v878
    %v904 = vpop.f32.mrf.mxu0
    %v905 = vadd.f32 %v864, %v904
    %906 = vmatmul.f32.gmra.mxu0 %v880
    %v907 = vpop.f32.mrf.mxu0
    %v908 = vadd.f32 %v869, %v907
    %909 = vmatmul.f32.gmra.mxu0 %v882
    %v910 = vpop.f32.mrf.mxu0
    %v911 = vadd.f32 %v874, %v910
    %912 = vdwg.mxu0
    %v913 = vmul.f32 %v822, 0.0
    %v914 = vmul.f32 %v823, 0.0
    %v915 = vmul.f32 %v824, 0.0
    %v916 = vmul.f32 %v825, 0.0
    %v917 = vsel %vm40, %v913, 0.0
    %v918 = vsel %vm40, %v914, 0.0
    %v919 = vadd.f32 %v917, %v918
    %v920 = vsel %vm40, %v915, 0.0
    %v921 = vadd.f32 %v919, %v920
    %v922 = vsel %vm40, %v916, 0.0
    %v923 = vadd.f32 %v921, %v922
    %v924 = vrot.slane %v923, 4
    %v925 = vadd.f32 %v923, %v924
    %v926 = vrot.slane %v925, 2
    %v927 = vadd.f32 %v925, %v926
    %v928 = vrot.slane %v927, 1
    %v929 = vadd.f32 %v927, %v928
    %v930 = vmul.f32 %v828, 0.0
    %v931 = vmul.f32 %v829, 0.0
    %v932 = vmul.f32 %v830, 0.0
    %v933 = vmul.f32 %v831, 0.0
    %938 = vrot.lane.b32.xlu0 %v930, 96
    %v939 = vpop.permute.xlu0 %938
    %940 = vrot.lane.b32.xlu0 %v931, 96
    %v941 = vpop.permute.xlu0 %940
    %942 = vrot.lane.b32.xlu0 %v932, 96
    %v943 = vpop.permute.xlu0 %942
    %944 = vrot.lane.b32.xlu0 %v933, 96
    %v945 = vpop.permute.xlu0 %944
    %v950 = vsel %vm40, %v939, 0.0
    %951 = vadd.xlane.f32.xlu0 %v950
    %v952 = vpop.xlane.xlu0 %951
    %v953 = vsel %vm40, %v941, 0.0
    %954 = vadd.xlane.f32.xlu0 %v953
    %v955 = vpop.xlane.xlu0 %954
    %v956 = vsel %vm40, %v943, 0.0
    %957 = vadd.xlane.f32.xlu0 %v956
    %v958 = vpop.xlane.xlu0 %957
    %v959 = vsel %vm40, %v945, 0.0
    %960 = vadd.xlane.f32.xlu0 %v959
    %v961 = vpop.xlane.xlu0 %960
    %v962 = vadd.f32 %v854, %v929
    %v963 = vtanh.pop %v962
    %v964 = vadd.f32 %v902, %v952
    %v965 = vadd.f32 %v905, %v955
    %v966 = vadd.f32 %v908, %v958
    %v967 = vadd.f32 %v911, %v961
    %v968 = vtanh.pop %v964
    %v969 = vtanh.pop %v965
    %v970 = vtanh.pop %v966
    %v971 = vtanh.pop %v967
    %973 = vset.pattern.permute.xlu0 0
    %974 = vperm.xlu0 %973, %v968
    %v975 = vpop.permute.xlu0 %974
    %978 = vset.pattern.permute.xlu0 0
    %979 = vperm.xlu0 %978, %v969
    %v980 = vpop.permute.xlu0 %979
    %983 = vset.pattern.permute.xlu0 0
    %984 = vperm.xlu0 %983, %v970
    %v985 = vpop.permute.xlu0 %984
    %988 = vset.pattern.permute.xlu0 0
    %989 = vperm.xlu0 %988, %v971
    %v990 = vpop.permute.xlu0 %989
    %v992 = vmul.f32 %v822, %v975
    %v993 = vmul.f32 %v823, %v980
    %v994 = vmul.f32 %v824, %v985
    %v995 = vmul.f32 %v825, %v990
    %v996 = vsel %vm40, %v992, 0.0
    %v997 = vsel %vm40, %v993, 0.0
    %v998 = vadd.f32 %v996, %v997
    %v999 = vsel %vm40, %v994, 0.0
    %v1000 = vadd.f32 %v998, %v999
    %v1001 = vsel %vm40, %v995, 0.0
    %v1002 = vadd.f32 %v1000, %v1001
    %v1003 = vrot.slane %v1002, 4
    %v1004 = vadd.f32 %v1002, %v1003
    %v1005 = vrot.slane %v1004, 2
    %v1006 = vadd.f32 %v1004, %v1005
    %v1007 = vrot.slane %v1006, 1
    %v1008 = vadd.f32 %v1006, %v1007
    %v1009 = vperm.slane %v963, 0
    %1011 = vrot.lane.b32.xlu0 %v1009, 32
    %v1012 = vpop.permute.xlu0 %1011
    %v1014 = vmul.f32 %v828, %v1012
    %v1015 = vmul.f32 %v829, %v1012
    %v1016 = vmul.f32 %v830, %v1012
    %v1017 = vmul.f32 %v831, %v1012
    %1022 = vrot.lane.b32.xlu0 %v1014, 96
    %v1023 = vpop.permute.xlu0 %1022
    %1024 = vrot.lane.b32.xlu0 %v1015, 96
    %v1025 = vpop.permute.xlu0 %1024
    %1026 = vrot.lane.b32.xlu0 %v1016, 96
    %v1027 = vpop.permute.xlu0 %1026
    %1028 = vrot.lane.b32.xlu0 %v1017, 96
    %v1029 = vpop.permute.xlu0 %1028
    %v1034 = vsel %vm40, %v1023, 0.0
    %1035 = vadd.xlane.f32.xlu0 %v1034
    %v1036 = vpop.xlane.xlu0 %1035
    %v1037 = vsel %vm40, %v1025, 0.0
    %1038 = vadd.xlane.f32.xlu0 %v1037
    %v1039 = vpop.xlane.xlu0 %1038
    %v1040 = vsel %vm40, %v1027, 0.0
    %1041 = vadd.xlane.f32.xlu0 %v1040
    %v1042 = vpop.xlane.xlu0 %1041
    %v1043 = vsel %vm40, %v1029, 0.0
    %1044 = vadd.xlane.f32.xlu0 %v1043
    %v1045 = vpop.xlane.xlu0 %1044
    %v1046 = vadd.f32 %v854, %v1008
    %v1047 = vtanh.pop %v1046
    %v1048 = vadd.f32 %v902, %v1036
    %v1049 = vadd.f32 %v905, %v1039
    %v1050 = vadd.f32 %v908, %v1042
    %v1051 = vadd.f32 %v911, %v1045
    %v1052 = vtanh.pop %v1048
    %v1053 = vtanh.pop %v1049
    %v1054 = vtanh.pop %v1050
    %v1055 = vtanh.pop %v1051
    %1057 = vset.pattern.permute.xlu0 1
    %1058 = vperm.xlu0 %1057, %v1052
    %v1059 = vpop.permute.xlu0 %1058
    %1062 = vset.pattern.permute.xlu0 1
    %1063 = vperm.xlu0 %1062, %v1053
    %v1064 = vpop.permute.xlu0 %1063
    %1067 = vset.pattern.permute.xlu0 1
    %1068 = vperm.xlu0 %1067, %v1054
    %v1069 = vpop.permute.xlu0 %1068
    %1072 = vset.pattern.permute.xlu0 1
    %1073 = vperm.xlu0 %1072, %v1055
    %v1074 = vpop.permute.xlu0 %1073
    %v1076 = vmul.f32 %v822, %v1059
    %v1077 = vmul.f32 %v823, %v1064
    %v1078 = vmul.f32 %v824, %v1069
    %v1079 = vmul.f32 %v825, %v1074
    %v1080 = vsel %vm40, %v1076, 0.0
    %v1081 = vsel %vm40, %v1077, 0.0
    %v1082 = vadd.f32 %v1080, %v1081
    %v1083 = vsel %vm40, %v1078, 0.0
    %v1084 = vadd.f32 %v1082, %v1083
    %v1085 = vsel %vm40, %v1079, 0.0
    %v1086 = vadd.f32 %v1084, %v1085
    %v1087 = vrot.slane %v1086, 4
    %v1088 = vadd.f32 %v1086, %v1087
    %v1089 = vrot.slane %v1088, 2
    %v1090 = vadd.f32 %v1088, %v1089
    %v1091 = vrot.slane %v1090, 1
    %v1092 = vadd.f32 %v1090, %v1091
    %v1093 = vperm.slane %v1047, 1
    %1095 = vrot.lane.b32.xlu0 %v1093, 32
    %v1096 = vpop.permute.xlu0 %1095
    %v1098 = vmul.f32 %v828, %v1096
    %v1099 = vmul.f32 %v829, %v1096
    %v1100 = vmul.f32 %v830, %v1096
    %v1101 = vmul.f32 %v831, %v1096
    %1106 = vrot.lane.b32.xlu0 %v1098, 96
    %v1107 = vpop.permute.xlu0 %1106
    %1108 = vrot.lane.b32.xlu0 %v1099, 96
    %v1109 = vpop.permute.xlu0 %1108
    %1110 = vrot.lane.b32.xlu0 %v1100, 96
    %v1111 = vpop.permute.xlu0 %1110
    %1112 = vrot.lane.b32.xlu0 %v1101, 96
    %v1113 = vpop.permute.xlu0 %1112
    %v1118 = vsel %vm40, %v1107, 0.0
    %1119 = vadd.xlane.f32.xlu0 %v1118
    %v1120 = vpop.xlane.xlu0 %1119
    %v1121 = vsel %vm40, %v1109, 0.0
    %1122 = vadd.xlane.f32.xlu0 %v1121
    %v1123 = vpop.xlane.xlu0 %1122
    %v1124 = vsel %vm40, %v1111, 0.0
    %1125 = vadd.xlane.f32.xlu0 %v1124
    %v1126 = vpop.xlane.xlu0 %1125
    %v1127 = vsel %vm40, %v1113, 0.0
    %1128 = vadd.xlane.f32.xlu0 %v1127
    %v1129 = vpop.xlane.xlu0 %1128
    %v1130 = vadd.f32 %v854, %v1092
    %v1131 = vtanh.pop %v1130
    %v1132 = vadd.f32 %v902, %v1120
    %v1133 = vadd.f32 %v905, %v1123
    %v1134 = vadd.f32 %v908, %v1126
    %v1135 = vadd.f32 %v911, %v1129
    %v1136 = vtanh.pop %v1132
    %v1137 = vtanh.pop %v1133
    %v1138 = vtanh.pop %v1134
    %v1139 = vtanh.pop %v1135
    %1141 = vset.pattern.permute.xlu0 2
    %1142 = vperm.xlu0 %1141, %v1136
    %v1143 = vpop.permute.xlu0 %1142
    %1146 = vset.pattern.permute.xlu0 2
    %1147 = vperm.xlu0 %1146, %v1137
    %v1148 = vpop.permute.xlu0 %1147
    %1151 = vset.pattern.permute.xlu0 2
    %1152 = vperm.xlu0 %1151, %v1138
    %v1153 = vpop.permute.xlu0 %1152
    %1156 = vset.pattern.permute.xlu0 2
    %1157 = vperm.xlu0 %1156, %v1139
    %v1158 = vpop.permute.xlu0 %1157
    %v1160 = vmul.f32 %v822, %v1143
    %v1161 = vmul.f32 %v823, %v1148
    %v1162 = vmul.f32 %v824, %v1153
    %v1163 = vmul.f32 %v825, %v1158
    %v1164 = vsel %vm40, %v1160, 0.0
    %v1165 = vsel %vm40, %v1161, 0.0
    %v1166 = vadd.f32 %v1164, %v1165
    %v1167 = vsel %vm40, %v1162, 0.0
    %v1168 = vadd.f32 %v1166, %v1167
    %v1169 = vsel %vm40, %v1163, 0.0
    %v1170 = vadd.f32 %v1168, %v1169
    %v1171 = vrot.slane %v1170, 4
    %v1172 = vadd.f32 %v1170, %v1171
    %v1173 = vrot.slane %v1172, 2
    %v1174 = vadd.f32 %v1172, %v1173
    %v1175 = vrot.slane %v1174, 1
    %v1176 = vadd.f32 %v1174, %v1175
    %v1177 = vperm.slane %v1131, 2
    %1179 = vrot.lane.b32.xlu0 %v1177, 32
    %v1180 = vpop.permute.xlu0 %1179
    %v1182 = vmul.f32 %v828, %v1180
    %v1183 = vmul.f32 %v829, %v1180
    %v1184 = vmul.f32 %v830, %v1180
    %v1185 = vmul.f32 %v831, %v1180
    %1190 = vrot.lane.b32.xlu0 %v1182, 96
    %v1191 = vpop.permute.xlu0 %1190
    %1192 = vrot.lane.b32.xlu0 %v1183, 96
    %v1193 = vpop.permute.xlu0 %1192
    %1194 = vrot.lane.b32.xlu0 %v1184, 96
    %v1195 = vpop.permute.xlu0 %1194
    %1196 = vrot.lane.b32.xlu0 %v1185, 96
    %v1197 = vpop.permute.xlu0 %1196
    %v1202 = vsel %vm40, %v1191, 0.0
    %1203 = vadd.xlane.f32.xlu0 %v1202
    %v1204 = vpop.xlane.xlu0 %1203
    %v1205 = vsel %vm40, %v1193, 0.0
    %1206 = vadd.xlane.f32.xlu0 %v1205
    %v1207 = vpop.xlane.xlu0 %1206
    %v1208 = vsel %vm40, %v1195, 0.0
    %1209 = vadd.xlane.f32.xlu0 %v1208
    %v1210 = vpop.xlane.xlu0 %1209
    %v1211 = vsel %vm40, %v1197, 0.0
    %1212 = vadd.xlane.f32.xlu0 %v1211
    %v1213 = vpop.xlane.xlu0 %1212
    %v1214 = vadd.f32 %v854, %v1176
    %v1215 = vtanh.pop %v1214
    %v1216 = vadd.f32 %v902, %v1204
    %v1217 = vadd.f32 %v905, %v1207
    %v1218 = vadd.f32 %v908, %v1210
    %v1219 = vadd.f32 %v911, %v1213
    %v1220 = vtanh.pop %v1216
    %v1221 = vtanh.pop %v1217
    %v1222 = vtanh.pop %v1218
    %v1223 = vtanh.pop %v1219
    %1225 = vset.pattern.permute.xlu0 3
    %1226 = vperm.xlu0 %1225, %v1220
    %v1227 = vpop.permute.xlu0 %1226
    %1230 = vset.pattern.permute.xlu0 3
    %1231 = vperm.xlu0 %1230, %v1221
    %v1232 = vpop.permute.xlu0 %1231
    %1235 = vset.pattern.permute.xlu0 3
    %1236 = vperm.xlu0 %1235, %v1222
    %v1237 = vpop.permute.xlu0 %1236
    %1240 = vset.pattern.permute.xlu0 3
    %1241 = vperm.xlu0 %1240, %v1223
    %v1242 = vpop.permute.xlu0 %1241
    %v1244 = vmul.f32 %v822, %v1227
    %v1245 = vmul.f32 %v823, %v1232
    %v1246 = vmul.f32 %v824, %v1237
    %v1247 = vmul.f32 %v825, %v1242
    %v1248 = vsel %vm40, %v1244, 0.0
    %v1249 = vsel %vm40, %v1245, 0.0
    %v1250 = vadd.f32 %v1248, %v1249
    %v1251 = vsel %vm40, %v1246, 0.0
    %v1252 = vadd.f32 %v1250, %v1251
    %v1253 = vsel %vm40, %v1247, 0.0
    %v1254 = vadd.f32 %v1252, %v1253
    %v1255 = vrot.slane %v1254, 4
    %v1256 = vadd.f32 %v1254, %v1255
    %v1257 = vrot.slane %v1256, 2
    %v1258 = vadd.f32 %v1256, %v1257
    %v1259 = vrot.slane %v1258, 1
    %v1260 = vadd.f32 %v1258, %v1259
    %v1261 = vperm.slane %v1215, 3
    %1263 = vrot.lane.b32.xlu0 %v1261, 32
    %v1264 = vpop.permute.xlu0 %1263
    %v1266 = vmul.f32 %v828, %v1264
    %v1267 = vmul.f32 %v829, %v1264
    %v1268 = vmul.f32 %v830, %v1264
    %v1269 = vmul.f32 %v831, %v1264
    %1274 = vrot.lane.b32.xlu0 %v1266, 96
    %v1275 = vpop.permute.xlu0 %1274
    %1276 = vrot.lane.b32.xlu0 %v1267, 96
    %v1277 = vpop.permute.xlu0 %1276
    %1278 = vrot.lane.b32.xlu0 %v1268, 96
    %v1279 = vpop.permute.xlu0 %1278
    %1280 = vrot.lane.b32.xlu0 %v1269, 96
    %v1281 = vpop.permute.xlu0 %1280
    %v1286 = vsel %vm40, %v1275, 0.0
    %1287 = vadd.xlane.f32.xlu0 %v1286
    %v1288 = vpop.xlane.xlu0 %1287
    %v1289 = vsel %vm40, %v1277, 0.0
    %1290 = vadd.xlane.f32.xlu0 %v1289
    %v1291 = vpop.xlane.xlu0 %1290
    %v1292 = vsel %vm40, %v1279, 0.0
    %1293 = vadd.xlane.f32.xlu0 %v1292
    %v1294 = vpop.xlane.xlu0 %1293
    %v1295 = vsel %vm40, %v1281, 0.0
    %1296 = vadd.xlane.f32.xlu0 %v1295
    %v1297 = vpop.xlane.xlu0 %1296
    %v1298 = vadd.f32 %v854, %v1260
    %v1299 = vtanh.pop %v1298
    %v1300 = vadd.f32 %v902, %v1288
    %v1301 = vadd.f32 %v905, %v1291
    %v1302 = vadd.f32 %v908, %v1294
    %v1303 = vadd.f32 %v911, %v1297
    %v1304 = vtanh.pop %v1300
    %v1305 = vtanh.pop %v1301
    %v1306 = vtanh.pop %v1302
    %v1307 = vtanh.pop %v1303
    %1309 = vset.pattern.permute.xlu0 4
    %1310 = vperm.xlu0 %1309, %v1304
    %v1311 = vpop.permute.xlu0 %1310
    %1314 = vset.pattern.permute.xlu0 4
    %1315 = vperm.xlu0 %1314, %v1305
    %v1316 = vpop.permute.xlu0 %1315
    %1319 = vset.pattern.permute.xlu0 4
    %1320 = vperm.xlu0 %1319, %v1306
    %v1321 = vpop.permute.xlu0 %1320
    %1324 = vset.pattern.permute.xlu0 4
    %1325 = vperm.xlu0 %1324, %v1307
    %v1326 = vpop.permute.xlu0 %1325
    %v1328 = vmul.f32 %v822, %v1311
    %v1329 = vmul.f32 %v823, %v1316
    %v1330 = vmul.f32 %v824, %v1321
    %v1331 = vmul.f32 %v825, %v1326
    %v1332 = vsel %vm40, %v1328, 0.0
    %v1333 = vsel %vm40, %v1329, 0.0
    %v1334 = vadd.f32 %v1332, %v1333
    %v1335 = vsel %vm40, %v1330, 0.0
    %v1336 = vadd.f32 %v1334, %v1335
    %v1337 = vsel %vm40, %v1331, 0.0
    %v1338 = vadd.f32 %v1336, %v1337
    %v1339 = vrot.slane %v1338, 4
    %v1340 = vadd.f32 %v1338, %v1339
    %v1341 = vrot.slane %v1340, 2
    %v1342 = vadd.f32 %v1340, %v1341
    %v1343 = vrot.slane %v1342, 1
    %v1344 = vadd.f32 %v1342, %v1343
    %v1345 = vperm.slane %v1299, 4
    %1347 = vrot.lane.b32.xlu0 %v1345, 32
    %v1348 = vpop.permute.xlu0 %1347
    %v1350 = vmul.f32 %v828, %v1348
    %v1351 = vmul.f32 %v829, %v1348
    %v1352 = vmul.f32 %v830, %v1348
    %v1353 = vmul.f32 %v831, %v1348
    %1358 = vrot.lane.b32.xlu0 %v1350, 96
    %v1359 = vpop.permute.xlu0 %1358
    %1360 = vrot.lane.b32.xlu0 %v1351, 96
    %v1361 = vpop.permute.xlu0 %1360
    %1362 = vrot.lane.b32.xlu0 %v1352, 96
    %v1363 = vpop.permute.xlu0 %1362
    %1364 = vrot.lane.b32.xlu0 %v1353, 96
    %v1365 = vpop.permute.xlu0 %1364
    %v1370 = vsel %vm40, %v1359, 0.0
    %1371 = vadd.xlane.f32.xlu0 %v1370
    %v1372 = vpop.xlane.xlu0 %1371
    %v1373 = vsel %vm40, %v1361, 0.0
    %1374 = vadd.xlane.f32.xlu0 %v1373
    %v1375 = vpop.xlane.xlu0 %1374
    %v1376 = vsel %vm40, %v1363, 0.0
    %1377 = vadd.xlane.f32.xlu0 %v1376
    %v1378 = vpop.xlane.xlu0 %1377
    %v1379 = vsel %vm40, %v1365, 0.0
    %1380 = vadd.xlane.f32.xlu0 %v1379
    %v1381 = vpop.xlane.xlu0 %1380
    %v1382 = vadd.f32 %v854, %v1344
    %v1383 = vtanh.pop %v1382
    %v1384 = vadd.f32 %v902, %v1372
    %v1385 = vadd.f32 %v905, %v1375
    %v1386 = vadd.f32 %v908, %v1378
    %v1387 = vadd.f32 %v911, %v1381
    %v1388 = vtanh.pop %v1384
    %v1389 = vtanh.pop %v1385
    %v1390 = vtanh.pop %v1386
    %v1391 = vtanh.pop %v1387
    %1393 = vset.pattern.permute.xlu0 5
    %1394 = vperm.xlu0 %1393, %v1388
    %v1395 = vpop.permute.xlu0 %1394
    %1398 = vset.pattern.permute.xlu0 5
    %1399 = vperm.xlu0 %1398, %v1389
    %v1400 = vpop.permute.xlu0 %1399
    %1403 = vset.pattern.permute.xlu0 5
    %1404 = vperm.xlu0 %1403, %v1390
    %v1405 = vpop.permute.xlu0 %1404
    %1408 = vset.pattern.permute.xlu0 5
    %1409 = vperm.xlu0 %1408, %v1391
    %v1410 = vpop.permute.xlu0 %1409
    %v1412 = vmul.f32 %v822, %v1395
    %v1413 = vmul.f32 %v823, %v1400
    %v1414 = vmul.f32 %v824, %v1405
    %v1415 = vmul.f32 %v825, %v1410
    %v1416 = vsel %vm40, %v1412, 0.0
    %v1417 = vsel %vm40, %v1413, 0.0
    %v1418 = vadd.f32 %v1416, %v1417
    %v1419 = vsel %vm40, %v1414, 0.0
    %v1420 = vadd.f32 %v1418, %v1419
    %v1421 = vsel %vm40, %v1415, 0.0
    %v1422 = vadd.f32 %v1420, %v1421
    %v1423 = vrot.slane %v1422, 4
    %v1424 = vadd.f32 %v1422, %v1423
    %v1425 = vrot.slane %v1424, 2
    %v1426 = vadd.f32 %v1424, %v1425
    %v1427 = vrot.slane %v1426, 1
    %v1428 = vadd.f32 %v1426, %v1427
    %v1429 = vperm.slane %v1383, 5
    %1431 = vrot.lane.b32.xlu0 %v1429, 32
    %v1432 = vpop.permute.xlu0 %1431
    %v1434 = vmul.f32 %v828, %v1432
    %v1435 = vmul.f32 %v829, %v1432
    %v1436 = vmul.f32 %v830, %v1432
    %v1437 = vmul.f32 %v831, %v1432
    %1442 = vrot.lane.b32.xlu0 %v1434, 96
    %v1443 = vpop.permute.xlu0 %1442
    %1444 = vrot.lane.b32.xlu0 %v1435, 96
    %v1445 = vpop.permute.xlu0 %1444
    %1446 = vrot.lane.b32.xlu0 %v1436, 96
    %v1447 = vpop.permute.xlu0 %1446
    %1448 = vrot.lane.b32.xlu0 %v1437, 96
    %v1449 = vpop.permute.xlu0 %1448
    %v1454 = vsel %vm40, %v1443, 0.0
    %1455 = vadd.xlane.f32.xlu0 %v1454
    %v1456 = vpop.xlane.xlu0 %1455
    %v1457 = vsel %vm40, %v1445, 0.0
    %1458 = vadd.xlane.f32.xlu0 %v1457
    %v1459 = vpop.xlane.xlu0 %1458
    %v1460 = vsel %vm40, %v1447, 0.0
    %1461 = vadd.xlane.f32.xlu0 %v1460
    %v1462 = vpop.xlane.xlu0 %1461
    %v1463 = vsel %vm40, %v1449, 0.0
    %1464 = vadd.xlane.f32.xlu0 %v1463
    %v1465 = vpop.xlane.xlu0 %1464
    %v1466 = vadd.f32 %v854, %v1428
    %v1467 = vtanh.pop %v1466
    %v1468 = vadd.f32 %v902, %v1456
    %v1469 = vadd.f32 %v905, %v1459
    %v1470 = vadd.f32 %v908, %v1462
    %v1471 = vadd.f32 %v911, %v1465
    %v1472 = vtanh.pop %v1468
    %v1473 = vtanh.pop %v1469
    %v1474 = vtanh.pop %v1470
    %v1475 = vtanh.pop %v1471
    %1477 = vset.pattern.permute.xlu0 6
    %1478 = vperm.xlu0 %1477, %v1472
    %v1479 = vpop.permute.xlu0 %1478
    %1482 = vset.pattern.permute.xlu0 6
    %1483 = vperm.xlu0 %1482, %v1473
    %v1484 = vpop.permute.xlu0 %1483
    %1487 = vset.pattern.permute.xlu0 6
    %1488 = vperm.xlu0 %1487, %v1474
    %v1489 = vpop.permute.xlu0 %1488
    %1492 = vset.pattern.permute.xlu0 6
    %1493 = vperm.xlu0 %1492, %v1475
    %v1494 = vpop.permute.xlu0 %1493
    %v1496 = vmul.f32 %v822, %v1479
    %v1497 = vmul.f32 %v823, %v1484
    %v1498 = vmul.f32 %v824, %v1489
    %v1499 = vmul.f32 %v825, %v1494
    %v1500 = vsel %vm40, %v1496, 0.0
    %v1501 = vsel %vm40, %v1497, 0.0
    %v1502 = vadd.f32 %v1500, %v1501
    %v1503 = vsel %vm40, %v1498, 0.0
    %v1504 = vadd.f32 %v1502, %v1503
    %v1505 = vsel %vm40, %v1499, 0.0
    %v1506 = vadd.f32 %v1504, %v1505
    %v1507 = vrot.slane %v1506, 4
    %v1508 = vadd.f32 %v1506, %v1507
    %v1509 = vrot.slane %v1508, 2
    %v1510 = vadd.f32 %v1508, %v1509
    %v1511 = vrot.slane %v1510, 1
    %v1512 = vadd.f32 %v1510, %v1511
    %v1513 = vadd.f32 %v854, %v1512
    %v1514 = vtanh.pop %v1513
    %v1515 = vsel %vm768, %v963, %v1047
    %v1516 = vsel %vm770, %v1515, %v1131
    %v1517 = vsel %vm772, %v1516, %v1215
    %v1518 = vsel %vm774, %v1517, %v1299
    %v1519 = vsel %vm776, %v1518, %v1383
    %v1520 = vsel %vm778, %v1519, %v1467
    %v1521 = vsel %vm780, %v1520, %v1514
    %v1522 = vld [vmem:[%s4] sm:$0xff]
    %v1523 = vld [vmem:[%s4 + $0x8] sm:$0xff]
    %v1524 = vld [vmem:[%s4 + $0x10] sm:$0xff]
    %v1525 = vld [vmem:[%s4 + $0x18] sm:$0xff]
    %v1526 = vld [vmem:[%s4 + $0x20] sm:$0x1]
    %v1527 = vmax.f32 %v1521, 0.0
    %v1528 = vperm.slane %v1526, 0
    %v1530 = vsel %vm40, %v1527, 0
    %1532 = vmatpush.msra.mxu0 0.0
    %1533 = vmatpush.msra.mxu0 0.0
    %1534 = vmatpush.msra.mxu0 0.0
    %1535 = vmatpush.msra.mxu0 0.0
    %1536 = vmatpush.msra.mxu0 0.0
    %1537 = vmatpush.msra.mxu0 0.0
    %1538 = vmatpush.msra.mxu0 0.0
    %1539 = vmatpush.msra.mxu0 0.0
    %1540 = vmatpush.msra.mxu0 0.0
    %1541 = vmatpush.msra.mxu0 0.0
    %1542 = vmatpush.msra.mxu0 0.0
    %1543 = vmatpush.msra.mxu0 0.0
    %1544 = vmatpush.msra.mxu0 %v1525
    %1545 = vmatpush.msra.mxu0 %v1524
    %1546 = vmatpush.msra.mxu0 %v1523
    %1547 = vmatpush.msra.mxu0 %v1522
    %1548 = vmatmul.f32.gmra.mxu0 %v1530
    %v1549 = vpop.f32.mrf.mxu0
    %v1550 = vadd.f32 %v1528, %v1549
    %1551 = vdwg.mxu0
    %vm1552 = vcmask 64512
    %v1553 = vsel %vm1552, %v1550, -inf
    %1554 = vmax.xlane.f32.xlu0 %v1553
    %v1555 = vpop.xlane.xlu0 %1554
    %v1556 = vsub.f32 %v1550, %v1555
    %v1557 = vmul.f32 %v1556, 1.442695
    %v1558 = vpow.pop %v1557
    %v1559 = vsel %vm1552, %v1558, 0.0
    %1560 = vadd.xlane.f32.xlu0 %v1559
    %v1561 = vpop.xlane.xlu0 %1560
    %v1562 = vlog2.pop %v1561
    %v1563 = vmul.f32 %v1562, 0.6931472
    %v1564 = vsub.f32 %v1556, %v1563
    %1565 = vst.msk [vmem:[#allocation2] sm:$0xff] %vm1552, %v1564
    // Predicated region
    $region22: #{rnn_forward.1} parent=1 // pred_check
      _
    $region23: #{rnn_forward.1} parent=1 // pred_check_branch
      %1567 = sbr.rel (0) target = $region25
    $region24: #{rnn_forward.1} parent=1 // pred_region
      %1569 = vsyncadd [#allocation3], 0
      %s1571 = sshll.u32 [#allocation2], 4
      %s1572 = int_to_ptr.vmem [resolvable:$true] %s1571
      %s1573 = sshll.u32 %s5, 4
      %s1574 = int_to_ptr.hbm [resolvable:$true] %s1573
      %1576 = dma.vmem_to_hbm [thread:$0]  %s1572, 128, %s1574, [#allocation3]
    $region25: #{rnn_forward.1} parent=1 // pred_fallthru
      _
    // Predicated region
    $region26: #{rnn_forward.1} parent=1 // pred_check
      _
    $region27: #{rnn_forward.1} parent=1 // pred_check_branch
      %1578 = sbr.rel (0) target = $region29
    $region28: #{rnn_forward.1} parent=1 // pred_region
      %1580 = dma.done [#allocation3], 128
    $region29: #{rnn_forward.1} parent=1 // pred_fallthru
      _
    %1581 = vsyncpa [#allocation3], 1

</llo_original>
